<compile_context>
chip_gen: v5e
topology: v5e:2x2
jax: 0.10.0
libtpu: 0.0.40
codegen_flags: <defaults>
</compile_context>

<pallas_src>
import jax
import jax.numpy as jnp
from jax.experimental import pallas as pl
from jax.experimental.pallas import tpu as pltpu

EPS = 1e-5
LANE = 128


def _round_up(n, m=LANE):
    return ((n + m - 1) // m) * m


def mlp_kernel(x_ref,
               w1_ref, gb1_ref,
               w2_ref, gb2_ref,
               w3_ref, gb3_ref,
               w4_ref, b4_ref,
               out_ref):
    inv_b = 1.0 / x_ref.shape[0]

    def linear_bn_relu(h_bf16, w_ref, gb_ref):
        # bf16 x bf16 MXU matmul, f32 accumulation.  The Linear bias is
        # omitted here: BatchNorm's mean subtraction cancels it exactly.
        h = jnp.dot(h_bf16, w_ref[...], preferred_element_type=jnp.float32)
        # One-pass BN stats: mean and E[h^2]; var = E[h^2] - mean^2.
        mean = jnp.sum(h, axis=0, keepdims=True) * inv_b
        var = jnp.sum(h * h, axis=0, keepdims=True) * inv_b - mean * mean
        # Fold gamma into scale and (beta, mean) into shift -> one fused
        # normalize pass over h, then ReLU and a single bf16 down-cast that
        # becomes the next layer's MXU operand.  gamma is zero-padded, so
        # padded lanes come out exactly 0.
        scale = jax.lax.rsqrt(var + EPS) * gb_ref[0:1, :]
        shift = gb_ref[1:2, :] - mean * scale
        return jnp.maximum(h * scale + shift, 0.0).astype(jnp.bfloat16)

    h = linear_bn_relu(x_ref[...], w1_ref, gb1_ref)
    h = linear_bn_relu(h, w2_ref, gb2_ref)
    h = linear_bn_relu(h, w3_ref, gb3_ref)
    out_ref[...] = (
        jnp.dot(h, w4_ref[...], preferred_element_type=jnp.float32)
        + b4_ref[...]
    ).astype(out_ref.dtype)


def network_forward(x, params, out_dim, *, vmem_limit_bytes=32 * 1024 * 1024):
    """Run the lane-padded, VMEM-resident MLP kernel; returns (B, out_dim) f32."""
    B = x.shape[0]
    in_pad = params["w1"].shape[0]
    out_pad = params["w4"].shape[1]

    # Fuse lane-pad + bf16 cast in the wrapper: the kernel receives a bf16,
    # lane-dense input and never touches f32 x.
    if x.shape[1] != in_pad:
        x = jnp.pad(x, ((0, 0), (0, in_pad - x.shape[1])))
    x = x.astype(jnp.bfloat16)

    args = (
        x,
        params["w1"], params["gb1"],
        params["w2"], params["gb2"],
        params["w3"], params["gb3"],
        params["w4"], params["b4"],
    )

    out_padded = pl.pallas_call(
        mlp_kernel,
        out_shape=jax.ShapeDtypeStruct((B, out_pad), jnp.float32),
        in_specs=[pl.BlockSpec(memory_space=pltpu.MemorySpace.VMEM)
                  for _ in args],
        out_specs=pl.BlockSpec(memory_space=pltpu.MemorySpace.VMEM),
        compiler_params=pltpu.CompilerParams(
            vmem_limit_bytes=vmem_limit_bytes),
    )(*args)
    return out_padded[:, :out_dim]


def init_params(key, input_dim, out_dim):
    """PyTorch-style Linear init (U(-1/sqrt(fan_in), +)), BN gamma=1, beta=0.

    Returns (padded, raw):
      padded: lane-padded kernel params.
        w{1..4}: (in_pad, out_pad) bf16, zero pad rows/cols.
        gb{1..3}: (2, out_pad) f32 -- row 0 gamma (zero-padded so padded lanes
                  stay exactly 0), row 1 beta.  Linear biases b1-b3 are NOT
                  passed to the kernel (cancelled by BN mean subtraction).
        b4: (1, out_pad) f32, zero-padded.
      raw:    unpadded f32 params (weights stored (in, out)) for the reference.
    """
    dims = [input_dim, 400, 200, 100, out_dim]
    pdims = [_round_up(d) for d in dims]
    raw, padded = {}, {}
    keys = jax.random.split(key, 8)
    for li in range(4):
        fan_in, fan_out = dims[li], dims[li + 1]
        p_in, p_out = pdims[li], pdims[li + 1]
        bound = 1.0 / float(fan_in) ** 0.5
        w = jax.random.uniform(keys[2 * li], (fan_in, fan_out),
                               minval=-bound, maxval=bound, dtype=jnp.float32)
        b = jax.random.uniform(keys[2 * li + 1], (1, fan_out),
                               minval=-bound, maxval=bound, dtype=jnp.float32)
        raw[f"w{li + 1}"] = w
        raw[f"b{li + 1}"] = b
        padded[f"w{li + 1}"] = jnp.pad(
            w, ((0, p_in - fan_in), (0, p_out - fan_out))).astype(jnp.bfloat16)
        if li < 3:  # BN only on the first three layers
            g = jnp.ones((1, fan_out), jnp.float32)
            be = jnp.zeros((1, fan_out), jnp.float32)
            raw[f"g{li + 1}"] = g
            raw[f"be{li + 1}"] = be
            padded[f"gb{li + 1}"] = jnp.concatenate(
                [jnp.pad(g, ((0, 0), (0, p_out - fan_out))),
                 jnp.pad(be, ((0, 0), (0, p_out - fan_out)))], axis=0)
        else:
            padded["b4"] = jnp.pad(b, ((0, 0), (0, p_out - fan_out)))
    return padded, raw


def reference_forward(x, raw, bf16_matmul=True):
    """Pure-JAX reference on the UNPADDED parameters (PyTorch semantics:
    Linear biases included; BN cancels b1-b3 mathematically).

    bf16_matmul=True mirrors the kernel's bf16-operand / f32-accumulation
    matmuls; False is the exact-f32 PyTorch-equivalent forward.
    """
    def mm(h, w, b):
        if bf16_matmul:
            return jnp.dot(h.astype(jnp.bfloat16), w.astype(jnp.bfloat16),
                           preferred_element_type=jnp.float32) + b
        return jnp.dot(h, w, preferred_element_type=jnp.float32) + b

    h = x.astype(jnp.float32)
    for li in range(1, 4):
        h = mm(h, raw[f"w{li}"], raw[f"b{li}"])
        mean = jnp.mean(h, axis=0, keepdims=True)
        var = jnp.mean((h - mean) ** 2, axis=0, keepdims=True)
        h = (h - mean) * jax.lax.rsqrt(var + EPS)
        h = h * raw[f"g{li}"] + raw[f"be{li}"]
        h = jnp.maximum(h, 0.0)
    return mm(h, raw["w4"], raw["b4"])


if __name__ == "__main__":
    key = jax.random.PRNGKey(0)
    k_x, k_p = jax.random.split(key)

    # Batch = 128 rows: fills the MXU height on v5e and amortizes the per-call
    # weight DMA / launch overhead (still a small problem size).
    batch, input_dim, out_dim = 128, 32, 10
    x = jax.random.normal(k_x, (batch, input_dim), dtype=jnp.float32)
    padded_params, raw_params = init_params(k_p, input_dim, out_dim)

    out = network_forward(x, padded_params, out_dim)
    out = jax.block_until_ready(out)
    assert out.shape == (batch, out_dim)

    # Numerics-matched reference (bf16 MXU operands, f32 accumulation).
    ref = reference_forward(x, raw_params, bf16_matmul=True)
    assert jnp.allclose(out, ref, atol=2e-3, rtol=2e-3), \
        float(jnp.max(jnp.abs(out - ref)))

    # Pure-f32 module semantics: only bf16 operand rounding separates us.
    ref_f32 = reference_forward(x, raw_params, bf16_matmul=False)
    assert jnp.allclose(out, ref_f32, atol=1e-1, rtol=1e-1), \
        float(jnp.max(jnp.abs(out - ref_f32)))

    print("KERNEL_OK")
</pallas_src>

<mosaic_0001>
module attributes {stable_mosaic.version = 11 : i64} {
  func.func @mlp_kernel(%arg0: memref<128x128xbf16, #tpu.memory_space<vmem>>, %arg1: memref<128x512xbf16, #tpu.memory_space<vmem>>, %arg2: memref<2x512xf32, #tpu.memory_space<vmem>>, %arg3: memref<512x256xbf16, #tpu.memory_space<vmem>>, %arg4: memref<2x256xf32, #tpu.memory_space<vmem>>, %arg5: memref<256x128xbf16, #tpu.memory_space<vmem>>, %arg6: memref<2x128xf32, #tpu.memory_space<vmem>>, %arg7: memref<128x128xbf16, #tpu.memory_space<vmem>>, %arg8: memref<1x128xf32, #tpu.memory_space<vmem>>, %arg9: memref<128x128xf32, #tpu.memory_space<vmem>>) attributes {dimension_semantics = [], scalar_prefetch = 0 : i64, scratch_operands = 0 : i64, tpu.core_type = #tpu.core_type<tc>} {
    %c0 = arith.constant 0 : index
    %c0_0 = arith.constant 0 : index
    %0 = vector.load %arg0[%c0, %c0_0] : memref<128x128xbf16, #tpu.memory_space<vmem>>, vector<128x128xbf16>
    %c0_1 = arith.constant 0 : index
    %c0_2 = arith.constant 0 : index
    %1 = vector.load %arg1[%c0_1, %c0_2] : memref<128x512xbf16, #tpu.memory_space<vmem>>, vector<128x512xbf16>
    %cst = arith.constant dense<0.000000e+00> : vector<128x512xf32>
    %2 = tpu.matmul %0, %1, %cst {dimension_numbers = #tpu.dot_dimension_numbers<[1], [0], [0], [1], [0, 0, 1, 1], [], []>} : vector<128x128xbf16>, vector<128x512xbf16>, vector<128x512xf32> -> vector<128x512xf32>
    %cst_3 = arith.constant dense<0.000000e+00> : vector<512xf32>
    %3 = vector.multi_reduction <add>, %2, %cst_3 [0] : vector<128x512xf32> to vector<512xf32>
    %4 = vector.shape_cast %3 : vector<512xf32> to vector<1x512xf32>
    %cst_4 = arith.constant 7.812500e-03 : f32
    %5 = vector.broadcast %cst_4 : f32 to vector<1x512xf32>
    %6 = arith.mulf %4, %5 : vector<1x512xf32>
    %7 = arith.mulf %2, %2 : vector<128x512xf32>
    %cst_5 = arith.constant dense<0.000000e+00> : vector<512xf32>
    %8 = vector.multi_reduction <add>, %7, %cst_5 [0] : vector<128x512xf32> to vector<512xf32>
    %9 = vector.shape_cast %8 : vector<512xf32> to vector<1x512xf32>
    %cst_6 = arith.constant 7.812500e-03 : f32
    %10 = vector.broadcast %cst_6 : f32 to vector<1x512xf32>
    %11 = arith.mulf %9, %10 : vector<1x512xf32>
    %12 = arith.mulf %6, %6 : vector<1x512xf32>
    %13 = arith.subf %11, %12 : vector<1x512xf32>
    %cst_7 = arith.constant 9.99999974E-6 : f32
    %14 = vector.broadcast %cst_7 : f32 to vector<1x512xf32>
    %15 = arith.addf %13, %14 : vector<1x512xf32>
    %16 = math.rsqrt %15 : vector<1x512xf32>
    %c0_8 = arith.constant 0 : index
    %c0_9 = arith.constant 0 : index
    %17 = vector.load %arg2[%c0_8, %c0_9] : memref<2x512xf32, #tpu.memory_space<vmem>>, vector<1x512xf32>
    %18 = arith.mulf %16, %17 : vector<1x512xf32>
    %c1 = arith.constant 1 : index
    %c0_10 = arith.constant 0 : index
    %19 = vector.load %arg2[%c1, %c0_10] : memref<2x512xf32, #tpu.memory_space<vmem>>, vector<1x512xf32>
    %20 = arith.mulf %6, %18 : vector<1x512xf32>
    %21 = arith.subf %19, %20 : vector<1x512xf32>
    %22 = vector.broadcast %18 : vector<1x512xf32> to vector<128x512xf32>
    %23 = arith.mulf %2, %22 : vector<128x512xf32>
    %24 = vector.broadcast %21 : vector<1x512xf32> to vector<128x512xf32>
    %25 = arith.addf %23, %24 : vector<128x512xf32>
    %cst_11 = arith.constant 0.000000e+00 : f32
    %26 = vector.broadcast %cst_11 : f32 to vector<128x512xf32>
    %27 = arith.maximumf %25, %26 : vector<128x512xf32>
    %28 = arith.truncf %27 : vector<128x512xf32> to vector<128x512xbf16>
    %c0_12 = arith.constant 0 : index
    %c0_13 = arith.constant 0 : index
    %29 = vector.load %arg3[%c0_12, %c0_13] : memref<512x256xbf16, #tpu.memory_space<vmem>>, vector<512x256xbf16>
    %cst_14 = arith.constant dense<0.000000e+00> : vector<128x256xf32>
    %30 = tpu.matmul %28, %29, %cst_14 {dimension_numbers = #tpu.dot_dimension_numbers<[1], [0], [0], [1], [0, 0, 1, 1], [], []>} : vector<128x512xbf16>, vector<512x256xbf16>, vector<128x256xf32> -> vector<128x256xf32>
    %cst_15 = arith.constant dense<0.000000e+00> : vector<256xf32>
    %31 = vector.multi_reduction <add>, %30, %cst_15 [0] : vector<128x256xf32> to vector<256xf32>
    %32 = vector.shape_cast %31 : vector<256xf32> to vector<1x256xf32>
    %cst_16 = arith.constant 7.812500e-03 : f32
    %33 = vector.broadcast %cst_16 : f32 to vector<1x256xf32>
    %34 = arith.mulf %32, %33 : vector<1x256xf32>
    %35 = arith.mulf %30, %30 : vector<128x256xf32>
    %cst_17 = arith.constant dense<0.000000e+00> : vector<256xf32>
    %36 = vector.multi_reduction <add>, %35, %cst_17 [0] : vector<128x256xf32> to vector<256xf32>
    %37 = vector.shape_cast %36 : vector<256xf32> to vector<1x256xf32>
    %cst_18 = arith.constant 7.812500e-03 : f32
    %38 = vector.broadcast %cst_18 : f32 to vector<1x256xf32>
    %39 = arith.mulf %37, %38 : vector<1x256xf32>
    %40 = arith.mulf %34, %34 : vector<1x256xf32>
    %41 = arith.subf %39, %40 : vector<1x256xf32>
    %cst_19 = arith.constant 9.99999974E-6 : f32
    %42 = vector.broadcast %cst_19 : f32 to vector<1x256xf32>
    %43 = arith.addf %41, %42 : vector<1x256xf32>
    %44 = math.rsqrt %43 : vector<1x256xf32>
    %c0_20 = arith.constant 0 : index
    %c0_21 = arith.constant 0 : index
    %45 = vector.load %arg4[%c0_20, %c0_21] : memref<2x256xf32, #tpu.memory_space<vmem>>, vector<1x256xf32>
    %46 = arith.mulf %44, %45 : vector<1x256xf32>
    %c1_22 = arith.constant 1 : index
    %c0_23 = arith.constant 0 : index
    %47 = vector.load %arg4[%c1_22, %c0_23] : memref<2x256xf32, #tpu.memory_space<vmem>>, vector<1x256xf32>
    %48 = arith.mulf %34, %46 : vector<1x256xf32>
    %49 = arith.subf %47, %48 : vector<1x256xf32>
    %50 = vector.broadcast %46 : vector<1x256xf32> to vector<128x256xf32>
    %51 = arith.mulf %30, %50 : vector<128x256xf32>
    %52 = vector.broadcast %49 : vector<1x256xf32> to vector<128x256xf32>
    %53 = arith.addf %51, %52 : vector<128x256xf32>
    %cst_24 = arith.constant 0.000000e+00 : f32
    %54 = vector.broadcast %cst_24 : f32 to vector<128x256xf32>
    %55 = arith.maximumf %53, %54 : vector<128x256xf32>
    %56 = arith.truncf %55 : vector<128x256xf32> to vector<128x256xbf16>
    %c0_25 = arith.constant 0 : index
    %c0_26 = arith.constant 0 : index
    %57 = vector.load %arg5[%c0_25, %c0_26] : memref<256x128xbf16, #tpu.memory_space<vmem>>, vector<256x128xbf16>
    %cst_27 = arith.constant dense<0.000000e+00> : vector<128x128xf32>
    %58 = tpu.matmul %56, %57, %cst_27 {dimension_numbers = #tpu.dot_dimension_numbers<[1], [0], [0], [1], [0, 0, 1, 1], [], []>} : vector<128x256xbf16>, vector<256x128xbf16>, vector<128x128xf32> -> vector<128x128xf32>
    %cst_28 = arith.constant dense<0.000000e+00> : vector<128xf32>
    %59 = vector.multi_reduction <add>, %58, %cst_28 [0] : vector<128x128xf32> to vector<128xf32>
    %60 = vector.shape_cast %59 : vector<128xf32> to vector<1x128xf32>
    %cst_29 = arith.constant 7.812500e-03 : f32
    %61 = vector.broadcast %cst_29 : f32 to vector<1x128xf32>
    %62 = arith.mulf %60, %61 : vector<1x128xf32>
    %63 = arith.mulf %58, %58 : vector<128x128xf32>
    %cst_30 = arith.constant dense<0.000000e+00> : vector<128xf32>
    %64 = vector.multi_reduction <add>, %63, %cst_30 [0] : vector<128x128xf32> to vector<128xf32>
    %65 = vector.shape_cast %64 : vector<128xf32> to vector<1x128xf32>
    %cst_31 = arith.constant 7.812500e-03 : f32
    %66 = vector.broadcast %cst_31 : f32 to vector<1x128xf32>
    %67 = arith.mulf %65, %66 : vector<1x128xf32>
    %68 = arith.mulf %62, %62 : vector<1x128xf32>
    %69 = arith.subf %67, %68 : vector<1x128xf32>
    %cst_32 = arith.constant 9.99999974E-6 : f32
    %70 = vector.broadcast %cst_32 : f32 to vector<1x128xf32>
    %71 = arith.addf %69, %70 : vector<1x128xf32>
    %72 = math.rsqrt %71 : vector<1x128xf32>
    %c0_33 = arith.constant 0 : index
    %c0_34 = arith.constant 0 : index
    %73 = vector.load %arg6[%c0_33, %c0_34] : memref<2x128xf32, #tpu.memory_space<vmem>>, vector<1x128xf32>
    %74 = arith.mulf %72, %73 : vector<1x128xf32>
    %c1_35 = arith.constant 1 : index
    %c0_36 = arith.constant 0 : index
    %75 = vector.load %arg6[%c1_35, %c0_36] : memref<2x128xf32, #tpu.memory_space<vmem>>, vector<1x128xf32>
    %76 = arith.mulf %62, %74 : vector<1x128xf32>
    %77 = arith.subf %75, %76 : vector<1x128xf32>
    %78 = vector.broadcast %74 : vector<1x128xf32> to vector<128x128xf32>
    %79 = arith.mulf %58, %78 : vector<128x128xf32>
    %80 = vector.broadcast %77 : vector<1x128xf32> to vector<128x128xf32>
    %81 = arith.addf %79, %80 : vector<128x128xf32>
    %cst_37 = arith.constant 0.000000e+00 : f32
    %82 = vector.broadcast %cst_37 : f32 to vector<128x128xf32>
    %83 = arith.maximumf %81, %82 : vector<128x128xf32>
    %84 = arith.truncf %83 : vector<128x128xf32> to vector<128x128xbf16>
    %c0_38 = arith.constant 0 : index
    %c0_39 = arith.constant 0 : index
    %85 = vector.load %arg7[%c0_38, %c0_39] : memref<128x128xbf16, #tpu.memory_space<vmem>>, vector<128x128xbf16>
    %cst_40 = arith.constant dense<0.000000e+00> : vector<128x128xf32>
    %86 = tpu.matmul %84, %85, %cst_40 {dimension_numbers = #tpu.dot_dimension_numbers<[1], [0], [0], [1], [0, 0, 1, 1], [], []>} : vector<128x128xbf16>, vector<128x128xbf16>, vector<128x128xf32> -> vector<128x128xf32>
    %c0_41 = arith.constant 0 : index
    %c0_42 = arith.constant 0 : index
    %87 = vector.load %arg8[%c0_41, %c0_42] : memref<1x128xf32, #tpu.memory_space<vmem>>, vector<1x128xf32>
    %88 = vector.broadcast %87 : vector<1x128xf32> to vector<128x128xf32>
    %89 = arith.addf %86, %88 : vector<128x128xf32>
    %c0_43 = arith.constant 0 : index
    %c0_44 = arith.constant 0 : index
    %90 = vector.load %arg9[%c0_43, %c0_44] : memref<128x128xf32, #tpu.memory_space<vmem>>, vector<128x128xf32>
    tpu.vector_store %arg9[%c0_43, %c0_44], %89 {strides = array<i32>} : memref<128x128xf32, #tpu.memory_space<vmem>>, vector<128x128xf32>,
    return
  }
}

</mosaic_0001>

<llo_original>
// kernel: tpu_custom_call.1
$region0: #{tpu_custom_call.1}
  #allocation0 [shape = 'u32[]', space=smem, size = 0x4, offset = 0x4, fixed_abs, tag = 'smem constant byte address 0x4 - core index']
  #allocation1 [shape = 'u32[72,128]{1,0:T(1,128)}', space=vmem, size = 0x9000, scoped, tag = 'internal scratch']
  %s0 = inlined_call_operand.hbm [shape: bf16[128,128], index: 0, kind: input, shape index: {}]
  %s1 = inlined_call_operand.hbm [shape: bf16[128,512], index: 1, kind: input, shape index: {}]
  %s2 = inlined_call_operand.hbm [shape: f32[2,512], index: 2, kind: input, shape index: {}]
  %s3 = inlined_call_operand.hbm [shape: bf16[512,256], index: 3, kind: input, shape index: {}]
  %s4 = inlined_call_operand.hbm [shape: f32[2,256], index: 4, kind: input, shape index: {}]
  %s5 = inlined_call_operand.hbm [shape: bf16[256,128], index: 5, kind: input, shape index: {}]
  %s6 = inlined_call_operand.vmem [shape: f32[2,128], index: 6, kind: input, shape index: {}]
  %s7 = inlined_call_operand.hbm [shape: bf16[128,128], index: 7, kind: input, shape index: {}]
  %s8 = inlined_call_operand.vmem [shape: f32[1,128], index: 8, kind: input, shape index: {}]
  %s9 = inlined_call_operand.hbm [shape: f32[128,128], index: 9, kind: output, shape index: {}]
  %s10 = sld [smem:[#allocation0]]
  $region74: #{tpu_custom_call.1} parent=0
    _
  %s12 = ssub.s32 1, %s10
  %s13 = scalar_select 0, %s12, %s10
  $region1: #{tpu_custom_call.1} parent=0
    #allocation2 [shape = 'u8[32768]{0}', space=vmem, size = 0x8000, scoped, tag = 'input window, operand 0, single buffered']
    #allocation3 [shape = 's32[1]{0}', space=sflag, size = 0x4, scoped, tag = 'scoped memory for tpu_custom_call.1']
    #allocation4 [shape = 's32[1]{0}', space=sflag, size = 0x4, scoped, tag = 'scoped memory for tpu_custom_call.1']
    #allocation5 [shape = 'u8[131072]{0}', space=vmem, size = 0x20000, scoped, tag = 'input window, operand 1, single buffered']
    #allocation6 [shape = 's32[1]{0}', space=sflag, size = 0x4, scoped, tag = 'scoped memory for tpu_custom_call.1']
    #allocation7 [shape = 'u8[4096]{0}', space=vmem, size = 0x1000, scoped, tag = 'input window, operand 2, single buffered']
    #allocation8 [shape = 'u8[262144]{0}', space=vmem, size = 0x40000, scoped, tag = 'input window, operand 3, single buffered']
    #allocation9 [shape = 's32[1]{0}', space=sflag, size = 0x4, scoped, tag = 'scoped memory for tpu_custom_call.1']
    #allocation10 [shape = 'u8[2048]{0}', space=vmem, size = 0x800, scoped, tag = 'input window, operand 4, single buffered']
    #allocation11 [shape = 'u8[65536]{0}', space=vmem, size = 0x10000, scoped, tag = 'input window, operand 5, single buffered']
    #allocation12 [shape = 's32[1]{0}', space=sflag, size = 0x4, scoped, tag = 'scoped memory for tpu_custom_call.1']
    #allocation13 [shape = 'u8[32768]{0}', space=vmem, size = 0x8000, scoped, tag = 'input window, operand 7, single buffered']
    #allocation14 [shape = 'u8[65536]{0}', space=vmem, size = 0x10000, scoped, tag = 'output window, operand 0, single buffered']
    %14 = vsyncpa [#allocation3], 0
    %15 = vsyncpa [#allocation6], 0
    %16 = vsyncpa [#allocation9], 0
    %17 = vsyncpa [#allocation12], 0
    %18 = vsyncpa [#allocation4], 0
    // Predicated region
    $region2: #{tpu_custom_call.1} parent=1 // pred_check
      _
    $region3: #{tpu_custom_call.1} parent=1 // pred_check_branch
      %20 = sbr.rel (0) target = $region5
    $region4: #{tpu_custom_call.1} parent=1 // pred_region
      %22 = vsyncadd [#allocation3], 0
      %s23 = sshll.u32 %s0, 4
      %s24 = int_to_ptr.hbm [resolvable:$true] %s23
      %s25 = sshll.u32 [#allocation2], 4
      %s26 = int_to_ptr.vmem [resolvable:$true] %s25
      %31 = dma.hbm_to_vmem [thread:$0]  %s24, 1024, %s26, [#allocation3], 64, 64, 4
    $region5: #{tpu_custom_call.1} parent=1 // pred_fallthru
      _
    // Predicated region
    $region6: #{tpu_custom_call.1} parent=1 // pred_check
      _
    $region7: #{tpu_custom_call.1} parent=1 // pred_check_branch
      %33 = sbr.rel (0) target = $region9
    $region8: #{tpu_custom_call.1} parent=1 // pred_region
      %35 = vsyncadd [#allocation6], 0
      %s36 = sshll.u32 %s1, 4
      %s37 = int_to_ptr.hbm [resolvable:$true] %s36
      %s38 = sshll.u32 [#allocation5], 4
      %s39 = int_to_ptr.vmem [resolvable:$true] %s38
      %44 = dma.hbm_to_vmem [thread:$0]  %s37, 4096, %s39, [#allocation6], 256, 256, 16
    $region9: #{tpu_custom_call.1} parent=1 // pred_fallthru
      _
    // Predicated region
    $region10: #{tpu_custom_call.1} parent=1 // pred_check
      _
    $region11: #{tpu_custom_call.1} parent=1 // pred_check_branch
      %46 = sbr.rel (0) target = $region13
    $region12: #{tpu_custom_call.1} parent=1 // pred_region
      %48 = vsyncadd [#allocation6], 0
      %s50 = sshll.u32 %s2, 4
      %s51 = int_to_ptr.hbm [resolvable:$true] %s50
      %s52 = sshll.u32 [#allocation7], 4
      %s53 = int_to_ptr.vmem [resolvable:$true] %s52
      %55 = dma.hbm_to_vmem [thread:$0]  %s51, 128, %s53, [#allocation6]
    $region13: #{tpu_custom_call.1} parent=1 // pred_fallthru
      _
    // Predicated region
    $region14: #{tpu_custom_call.1} parent=1 // pred_check
      _
    $region15: #{tpu_custom_call.1} parent=1 // pred_check_branch
      %57 = sbr.rel (0) target = $region17
    $region16: #{tpu_custom_call.1} parent=1 // pred_region
      %59 = vsyncadd [#allocation9], 0
      %s60 = sshll.u32 %s3, 4
      %s61 = int_to_ptr.hbm [resolvable:$true] %s60
      %s62 = sshll.u32 [#allocation8], 4
      %s63 = int_to_ptr.vmem [resolvable:$true] %s62
      %68 = dma.hbm_to_vmem [thread:$0]  %s61, 8192, %s63, [#allocation9], 128, 128, 8
    $region17: #{tpu_custom_call.1} parent=1 // pred_fallthru
      _
    // Predicated region
    $region18: #{tpu_custom_call.1} parent=1 // pred_check
      _
    $region19: #{tpu_custom_call.1} parent=1 // pred_check_branch
      %70 = sbr.rel (0) target = $region21
    $region20: #{tpu_custom_call.1} parent=1 // pred_region
      %72 = vsyncadd [#allocation9], 0
      %s74 = sshll.u32 %s4, 4
      %s75 = int_to_ptr.hbm [resolvable:$true] %s74
      %s76 = sshll.u32 [#allocation10], 4
      %s77 = int_to_ptr.vmem [resolvable:$true] %s76
      %79 = dma.hbm_to_vmem [thread:$0]  %s75, 64, %s77, [#allocation9]
    $region21: #{tpu_custom_call.1} parent=1 // pred_fallthru
      _
    // Predicated region
    $region22: #{tpu_custom_call.1} parent=1 // pred_check
      _
    $region23: #{tpu_custom_call.1} parent=1 // pred_check_branch
      %81 = sbr.rel (0) target = $region25
    $region24: #{tpu_custom_call.1} parent=1 // pred_region
      %83 = vsyncadd [#allocation12], 0
      %s84 = sshll.u32 %s5, 4
      %s85 = int_to_ptr.hbm [resolvable:$true] %s84
      %s86 = sshll.u32 [#allocation11], 4
      %s87 = int_to_ptr.vmem [resolvable:$true] %s86
      %92 = dma.hbm_to_vmem [thread:$0]  %s85, 2048, %s87, [#allocation12], 64, 64, 4
    $region25: #{tpu_custom_call.1} parent=1 // pred_fallthru
      _
    // Predicated region
    $region26: #{tpu_custom_call.1} parent=1 // pred_check
      _
    $region27: #{tpu_custom_call.1} parent=1 // pred_check_branch
      %94 = sbr.rel (0) target = $region29
    $region28: #{tpu_custom_call.1} parent=1 // pred_region
      _
    $region29: #{tpu_custom_call.1} parent=1 // pred_fallthru
      _
    // Predicated region
    $region30: #{tpu_custom_call.1} parent=1 // pred_check
      _
    $region31: #{tpu_custom_call.1} parent=1 // pred_check_branch
      %96 = sbr.rel (0) target = $region33
    $region32: #{tpu_custom_call.1} parent=1 // pred_region
      %98 = vsyncadd [#allocation12], 0
      %s99 = sshll.u32 %s7, 4
      %s100 = int_to_ptr.hbm [resolvable:$true] %s99
      %s101 = sshll.u32 [#allocation13], 4
      %s102 = int_to_ptr.vmem [resolvable:$true] %s101
      %107 = dma.hbm_to_vmem [thread:$0]  %s100, 1024, %s102, [#allocation12], 64, 64, 4
    $region33: #{tpu_custom_call.1} parent=1 // pred_fallthru
      _
    // Predicated region
    $region34: #{tpu_custom_call.1} parent=1 // pred_check
      _
    $region35: #{tpu_custom_call.1} parent=1 // pred_check_branch
      %109 = sbr.rel (0) target = $region37
    $region36: #{tpu_custom_call.1} parent=1 // pred_region
      _
    $region37: #{tpu_custom_call.1} parent=1 // pred_fallthru
      _
    // Predicated region
    $region38: #{tpu_custom_call.1} parent=1 // pred_check
      _
    $region39: #{tpu_custom_call.1} parent=1 // pred_check_branch
      %111 = sbr.rel (0) target = $region41
    $region40: #{tpu_custom_call.1} parent=1 // pred_region
      %113 = dma.done [#allocation3], 1024
    $region41: #{tpu_custom_call.1} parent=1 // pred_fallthru
      _
    // Predicated region
    $region42: #{tpu_custom_call.1} parent=1 // pred_check
      _
    $region43: #{tpu_custom_call.1} parent=1 // pred_check_branch
      %115 = sbr.rel (0) target = $region45
    $region44: #{tpu_custom_call.1} parent=1 // pred_region
      %117 = dma.done [#allocation6], 4096
    $region45: #{tpu_custom_call.1} parent=1 // pred_fallthru
      _
    // Predicated region
    $region46: #{tpu_custom_call.1} parent=1 // pred_check
      _
    $region47: #{tpu_custom_call.1} parent=1 // pred_check_branch
      %119 = sbr.rel (0) target = $region49
    $region48: #{tpu_custom_call.1} parent=1 // pred_region
      %121 = dma.done [#allocation6], 128
    $region49: #{tpu_custom_call.1} parent=1 // pred_fallthru
      _
    // Predicated region
    $region50: #{tpu_custom_call.1} parent=1 // pred_check
      _
    $region51: #{tpu_custom_call.1} parent=1 // pred_check_branch
      %123 = sbr.rel (0) target = $region53
    $region52: #{tpu_custom_call.1} parent=1 // pred_region
      %125 = dma.done [#allocation9], 8192
    $region53: #{tpu_custom_call.1} parent=1 // pred_fallthru
      _
    // Predicated region
    $region54: #{tpu_custom_call.1} parent=1 // pred_check
      _
    $region55: #{tpu_custom_call.1} parent=1 // pred_check_branch
      %127 = sbr.rel (0) target = $region57
    $region56: #{tpu_custom_call.1} parent=1 // pred_region
      %129 = dma.done [#allocation9], 64
    $region57: #{tpu_custom_call.1} parent=1 // pred_fallthru
      _
    // Predicated region
    $region58: #{tpu_custom_call.1} parent=1 // pred_check
      _
    $region59: #{tpu_custom_call.1} parent=1 // pred_check_branch
      %131 = sbr.rel (0) target = $region61
    $region60: #{tpu_custom_call.1} parent=1 // pred_region
      %133 = dma.done [#allocation12], 2048
    $region61: #{tpu_custom_call.1} parent=1 // pred_fallthru
      _
    // Predicated region
    $region62: #{tpu_custom_call.1} parent=1 // pred_check
      _
    $region63: #{tpu_custom_call.1} parent=1 // pred_check_branch
      %135 = sbr.rel (0) target = $region65
    $region64: #{tpu_custom_call.1} parent=1 // pred_region
      %137 = dma.done [#allocation12], 1024
    $region65: #{tpu_custom_call.1} parent=1 // pred_fallthru
      _
    %v138 = vld [vmem:[#allocation2] sm:$0xf]
    %v139 = vld [vmem:[#allocation2 + $0x4] sm:$0xf]
    %v140 = vld [vmem:[#allocation2 + $0x8] sm:$0xf]
    %v141 = vld [vmem:[#allocation2 + $0xc] sm:$0xf]
    %v142 = vld [vmem:[#allocation2 + $0x10] sm:$0xf]
    %v143 = vld [vmem:[#allocation2 + $0x14] sm:$0xf]
    %v144 = vld [vmem:[#allocation2 + $0x18] sm:$0xf]
    %v145 = vld [vmem:[#allocation2 + $0x1c] sm:$0xf]
    %v146 = vld [vmem:[#allocation2 + $0x20] sm:$0xf]
    %v147 = vld [vmem:[#allocation2 + $0x24] sm:$0xf]
    %v148 = vld [vmem:[#allocation2 + $0x28] sm:$0xf]
    %v149 = vld [vmem:[#allocation2 + $0x2c] sm:$0xf]
    %v150 = vld [vmem:[#allocation2 + $0x30] sm:$0xf]
    %v151 = vld [vmem:[#allocation2 + $0x34] sm:$0xf]
    %v152 = vld [vmem:[#allocation2 + $0x38] sm:$0xf]
    %v153 = vld [vmem:[#allocation2 + $0x3c] sm:$0xf]
    %v154 = vld [vmem:[#allocation5] sm:$0xff]
    %v155 = vld [vmem:[#allocation5 + $0x8] sm:$0xff]
    %v156 = vld [vmem:[#allocation5 + $0x10] sm:$0xff]
    %v157 = vld [vmem:[#allocation5 + $0x18] sm:$0xff]
    %v158 = vld [vmem:[#allocation5 + $0x20] sm:$0xff]
    %v159 = vld [vmem:[#allocation5 + $0x28] sm:$0xff]
    %v160 = vld [vmem:[#allocation5 + $0x30] sm:$0xff]
    %v161 = vld [vmem:[#allocation5 + $0x38] sm:$0xff]
    %v162 = vld [vmem:[#allocation5 + $0x40] sm:$0xff]
    %v163 = vld [vmem:[#allocation5 + $0x48] sm:$0xff]
    %v164 = vld [vmem:[#allocation5 + $0x50] sm:$0xff]
    %v165 = vld [vmem:[#allocation5 + $0x58] sm:$0xff]
    %v166 = vld [vmem:[#allocation5 + $0x60] sm:$0xff]
    %v167 = vld [vmem:[#allocation5 + $0x68] sm:$0xff]
    %v168 = vld [vmem:[#allocation5 + $0x70] sm:$0xff]
    %v169 = vld [vmem:[#allocation5 + $0x78] sm:$0xff]
    %v170 = vld [vmem:[#allocation5 + $0x80] sm:$0xff]
    %v171 = vld [vmem:[#allocation5 + $0x88] sm:$0xff]
    %v172 = vld [vmem:[#allocation5 + $0x90] sm:$0xff]
    %v173 = vld [vmem:[#allocation5 + $0x98] sm:$0xff]
    %v174 = vld [vmem:[#allocation5 + $0xa0] sm:$0xff]
    %v175 = vld [vmem:[#allocation5 + $0xa8] sm:$0xff]
    %v176 = vld [vmem:[#allocation5 + $0xb0] sm:$0xff]
    %v177 = vld [vmem:[#allocation5 + $0xb8] sm:$0xff]
    %v178 = vld [vmem:[#allocation5 + $0xc0] sm:$0xff]
    %v179 = vld [vmem:[#allocation5 + $0xc8] sm:$0xff]
    %v180 = vld [vmem:[#allocation5 + $0xd0] sm:$0xff]
    %v181 = vld [vmem:[#allocation5 + $0xd8] sm:$0xff]
    %v182 = vld [vmem:[#allocation5 + $0xe0] sm:$0xff]
    %v183 = vld [vmem:[#allocation5 + $0xe8] sm:$0xff]
    %v184 = vld [vmem:[#allocation5 + $0xf0] sm:$0xff]
    %v185 = vld [vmem:[#allocation5 + $0xf8] sm:$0xff]
    %v202 = vunpack.c.l.b16 %v138
    %v203 = vunpack.c.l.b16 %v139
    %v204 = vunpack.c.l.b16 %v140
    %v205 = vunpack.c.l.b16 %v141
    %v206 = vunpack.c.l.b16 %v142
    %v207 = vunpack.c.l.b16 %v143
    %v208 = vunpack.c.l.b16 %v144
    %v209 = vunpack.c.l.b16 %v145
    %v210 = vunpack.c.l.b16 %v146
    %v211 = vunpack.c.l.b16 %v147
    %v212 = vunpack.c.l.b16 %v148
    %v213 = vunpack.c.l.b16 %v149
    %v214 = vunpack.c.l.b16 %v150
    %v215 = vunpack.c.l.b16 %v151
    %v216 = vunpack.c.l.b16 %v152
    %v217 = vunpack.c.l.b16 %v153
    %v218 = vpack.c.b16 %v203, %v202
    %v219 = vpack.c.b16 %v205, %v204
    %v220 = vpack.c.b16 %v207, %v206
    %v221 = vpack.c.b16 %v209, %v208
    %v222 = vpack.c.b16 %v211, %v210
    %v223 = vpack.c.b16 %v213, %v212
    %v224 = vpack.c.b16 %v215, %v214
    %v225 = vpack.c.b16 %v217, %v216
    %v266 = vunpack.c.l.b16 %v154
    %v267 = vunpack.c.h.b16 %v154
    %v268 = vunpack.c.l.b16 %v155
    %v269 = vunpack.c.h.b16 %v155
    %v270 = vunpack.c.l.b16 %v156
    %v271 = vunpack.c.h.b16 %v156
    %v272 = vunpack.c.l.b16 %v157
    %v273 = vunpack.c.h.b16 %v157
    %v274 = vunpack.c.l.b16 %v158
    %v275 = vunpack.c.h.b16 %v158
    %v276 = vunpack.c.l.b16 %v159
    %v277 = vunpack.c.h.b16 %v159
    %v278 = vunpack.c.l.b16 %v160
    %v279 = vunpack.c.h.b16 %v160
    %v280 = vunpack.c.l.b16 %v161
    %v281 = vunpack.c.h.b16 %v161
    %v282 = vunpack.c.l.b16 %v162
    %v283 = vunpack.c.h.b16 %v162
    %v284 = vunpack.c.l.b16 %v163
    %v285 = vunpack.c.h.b16 %v163
    %v286 = vunpack.c.l.b16 %v164
    %v287 = vunpack.c.h.b16 %v164
    %v288 = vunpack.c.l.b16 %v165
    %v289 = vunpack.c.h.b16 %v165
    %v290 = vunpack.c.l.b16 %v166
    %v291 = vunpack.c.h.b16 %v166
    %v292 = vunpack.c.l.b16 %v167
    %v293 = vunpack.c.h.b16 %v167
    %v294 = vunpack.c.l.b16 %v168
    %v295 = vunpack.c.h.b16 %v168
    %v296 = vunpack.c.l.b16 %v169
    %v297 = vunpack.c.h.b16 %v169
    %v298 = vunpack.c.l.b16 %v170
    %v299 = vunpack.c.h.b16 %v170
    %v300 = vunpack.c.l.b16 %v171
    %v301 = vunpack.c.h.b16 %v171
    %v302 = vunpack.c.l.b16 %v172
    %v303 = vunpack.c.h.b16 %v172
    %v304 = vunpack.c.l.b16 %v173
    %v305 = vunpack.c.h.b16 %v173
    %v306 = vunpack.c.l.b16 %v174
    %v307 = vunpack.c.h.b16 %v174
    %v308 = vunpack.c.l.b16 %v175
    %v309 = vunpack.c.h.b16 %v175
    %v310 = vunpack.c.l.b16 %v176
    %v311 = vunpack.c.h.b16 %v176
    %v312 = vunpack.c.l.b16 %v177
    %v313 = vunpack.c.h.b16 %v177
    %v314 = vunpack.c.l.b16 %v178
    %v315 = vunpack.c.h.b16 %v178
    %v316 = vunpack.c.l.b16 %v179
    %v317 = vunpack.c.h.b16 %v179
    %v318 = vunpack.c.l.b16 %v180
    %v319 = vunpack.c.h.b16 %v180
    %v320 = vunpack.c.l.b16 %v181
    %v321 = vunpack.c.h.b16 %v181
    %v322 = vunpack.c.l.b16 %v182
    %v323 = vunpack.c.h.b16 %v182
    %v324 = vunpack.c.l.b16 %v183
    %v325 = vunpack.c.h.b16 %v183
    %v326 = vunpack.c.l.b16 %v184
    %v327 = vunpack.c.h.b16 %v184
    %v328 = vunpack.c.l.b16 %v185
    %v329 = vunpack.c.h.b16 %v185
    %v330 = vpack.c.b16 %v270, %v266
    %v331 = vpack.c.b16 %v271, %v267
    %v332 = vpack.c.b16 %v272, %v268
    %v333 = vpack.c.b16 %v273, %v269
    %v334 = vpack.c.b16 %v278, %v274
    %v335 = vpack.c.b16 %v279, %v275
    %v336 = vpack.c.b16 %v280, %v276
    %v337 = vpack.c.b16 %v281, %v277
    %v338 = vpack.c.b16 %v286, %v282
    %v339 = vpack.c.b16 %v287, %v283
    %v340 = vpack.c.b16 %v288, %v284
    %v341 = vpack.c.b16 %v289, %v285
    %v342 = vpack.c.b16 %v294, %v290
    %v343 = vpack.c.b16 %v295, %v291
    %v344 = vpack.c.b16 %v296, %v292
    %v345 = vpack.c.b16 %v297, %v293
    %v346 = vpack.c.b16 %v302, %v298
    %v347 = vpack.c.b16 %v303, %v299
    %v348 = vpack.c.b16 %v304, %v300
    %v349 = vpack.c.b16 %v305, %v301
    %v350 = vpack.c.b16 %v310, %v306
    %v351 = vpack.c.b16 %v311, %v307
    %v352 = vpack.c.b16 %v312, %v308
    %v353 = vpack.c.b16 %v313, %v309
    %v354 = vpack.c.b16 %v318, %v314
    %v355 = vpack.c.b16 %v319, %v315
    %v356 = vpack.c.b16 %v320, %v316
    %v357 = vpack.c.b16 %v321, %v317
    %v358 = vpack.c.b16 %v326, %v322
    %v359 = vpack.c.b16 %v327, %v323
    %v360 = vpack.c.b16 %v328, %v324
    %v361 = vpack.c.b16 %v329, %v325
    %394 = vmatpush.bf16.msra.mxu0 %v358
    %395 = vmatpush.bf16.msra.mxu0 %v354
    %396 = vmatpush.bf16.msra.mxu0 %v350
    %397 = vmatpush.bf16.msra.mxu0 %v346
    %398 = vmatpush.bf16.msra.mxu0 %v342
    %399 = vmatpush.bf16.msra.mxu0 %v338
    %400 = vmatpush.bf16.msra.mxu0 %v334
    %401 = vmatpush.bf16.msra.mxu0 %v330
    %402 = vmatmul.bf16.gmra.mxu0 %v218
    %v403 = vpop.f32.mrf.mxu0
    %v404 = vadd.f32 0.0, %v403
    %v405 = vpop.f32.mrf.mxu0
    %v406 = vadd.f32 0.0, %v405
    %407 = vmatmul.bf16.gmra.mxu0 %v219
    %v408 = vpop.f32.mrf.mxu0
    %v409 = vadd.f32 0.0, %v408
    %v410 = vpop.f32.mrf.mxu0
    %v411 = vadd.f32 0.0, %v410
    %412 = vmatmul.bf16.gmra.mxu0 %v220
    %v413 = vpop.f32.mrf.mxu0
    %v414 = vadd.f32 0.0, %v413
    %v415 = vpop.f32.mrf.mxu0
    %v416 = vadd.f32 0.0, %v415
    %417 = vmatmul.bf16.gmra.mxu0 %v221
    %v418 = vpop.f32.mrf.mxu0
    %v419 = vadd.f32 0.0, %v418
    %v420 = vpop.f32.mrf.mxu0
    %v421 = vadd.f32 0.0, %v420
    %422 = vmatmul.bf16.gmra.mxu0 %v222
    %v423 = vpop.f32.mrf.mxu0
    %v424 = vadd.f32 0.0, %v423
    %v425 = vpop.f32.mrf.mxu0
    %v426 = vadd.f32 0.0, %v425
    %427 = vmatmul.bf16.gmra.mxu0 %v223
    %v428 = vpop.f32.mrf.mxu0
    %v429 = vadd.f32 0.0, %v428
    %v430 = vpop.f32.mrf.mxu0
    %v431 = vadd.f32 0.0, %v430
    %432 = vmatmul.bf16.gmra.mxu0 %v224
    %v433 = vpop.f32.mrf.mxu0
    %v434 = vadd.f32 0.0, %v433
    %v435 = vpop.f32.mrf.mxu0
    %v436 = vadd.f32 0.0, %v435
    %437 = vmatmul.bf16.gmra.mxu0 %v225
    %v438 = vpop.f32.mrf.mxu0
    %v439 = vadd.f32 0.0, %v438
    %v440 = vpop.f32.mrf.mxu0
    %v441 = vadd.f32 0.0, %v440
    %442 = vdwg.mxu0
    %443 = vmatpush.bf16.msra.mxu0 %v359
    %444 = vmatpush.bf16.msra.mxu0 %v355
    %445 = vmatpush.bf16.msra.mxu0 %v351
    %446 = vmatpush.bf16.msra.mxu0 %v347
    %447 = vmatpush.bf16.msra.mxu0 %v343
    %448 = vmatpush.bf16.msra.mxu0 %v339
    %449 = vmatpush.bf16.msra.mxu0 %v335
    %450 = vmatpush.bf16.msra.mxu0 %v331
    %451 = vmatmul.bf16.gmra.mxu0 %v218
    %v452 = vpop.f32.mrf.mxu0
    %v453 = vadd.f32 0.0, %v452
    %v454 = vpop.f32.mrf.mxu0
    %v455 = vadd.f32 0.0, %v454
    %456 = vmatmul.bf16.gmra.mxu0 %v219
    %v457 = vpop.f32.mrf.mxu0
    %v458 = vadd.f32 0.0, %v457
    %v459 = vpop.f32.mrf.mxu0
    %v460 = vadd.f32 0.0, %v459
    %461 = vmatmul.bf16.gmra.mxu0 %v220
    %v462 = vpop.f32.mrf.mxu0
    %v463 = vadd.f32 0.0, %v462
    %v464 = vpop.f32.mrf.mxu0
    %v465 = vadd.f32 0.0, %v464
    %466 = vmatmul.bf16.gmra.mxu0 %v221
    %v467 = vpop.f32.mrf.mxu0
    %v468 = vadd.f32 0.0, %v467
    %v469 = vpop.f32.mrf.mxu0
    %v470 = vadd.f32 0.0, %v469
    %471 = vmatmul.bf16.gmra.mxu0 %v222
    %v472 = vpop.f32.mrf.mxu0
    %v473 = vadd.f32 0.0, %v472
    %v474 = vpop.f32.mrf.mxu0
    %v475 = vadd.f32 0.0, %v474
    %476 = vmatmul.bf16.gmra.mxu0 %v223
    %v477 = vpop.f32.mrf.mxu0
    %v478 = vadd.f32 0.0, %v477
    %v479 = vpop.f32.mrf.mxu0
    %v480 = vadd.f32 0.0, %v479
    %481 = vmatmul.bf16.gmra.mxu0 %v224
    %v482 = vpop.f32.mrf.mxu0
    %v483 = vadd.f32 0.0, %v482
    %v484 = vpop.f32.mrf.mxu0
    %v485 = vadd.f32 0.0, %v484
    %486 = vmatmul.bf16.gmra.mxu0 %v225
    %v487 = vpop.f32.mrf.mxu0
    %v488 = vadd.f32 0.0, %v487
    %v489 = vpop.f32.mrf.mxu0
    %v490 = vadd.f32 0.0, %v489
    %491 = vdwg.mxu0
    %492 = vmatpush.bf16.msra.mxu0 %v360
    %493 = vmatpush.bf16.msra.mxu0 %v356
    %494 = vmatpush.bf16.msra.mxu0 %v352
    %495 = vmatpush.bf16.msra.mxu0 %v348
    %496 = vmatpush.bf16.msra.mxu0 %v344
    %497 = vmatpush.bf16.msra.mxu0 %v340
    %498 = vmatpush.bf16.msra.mxu0 %v336
    %499 = vmatpush.bf16.msra.mxu0 %v332
    %500 = vmatmul.bf16.gmra.mxu0 %v218
    %v501 = vpop.f32.mrf.mxu0
    %v502 = vadd.f32 0.0, %v501
    %v503 = vpop.f32.mrf.mxu0
    %v504 = vadd.f32 0.0, %v503
    %505 = vmatmul.bf16.gmra.mxu0 %v219
    %v506 = vpop.f32.mrf.mxu0
    %v507 = vadd.f32 0.0, %v506
    %v508 = vpop.f32.mrf.mxu0
    %v509 = vadd.f32 0.0, %v508
    %510 = vmatmul.bf16.gmra.mxu0 %v220
    %v511 = vpop.f32.mrf.mxu0
    %v512 = vadd.f32 0.0, %v511
    %v513 = vpop.f32.mrf.mxu0
    %v514 = vadd.f32 0.0, %v513
    %515 = vmatmul.bf16.gmra.mxu0 %v221
    %v516 = vpop.f32.mrf.mxu0
    %v517 = vadd.f32 0.0, %v516
    %v518 = vpop.f32.mrf.mxu0
    %v519 = vadd.f32 0.0, %v518
    %520 = vmatmul.bf16.gmra.mxu0 %v222
    %v521 = vpop.f32.mrf.mxu0
    %v522 = vadd.f32 0.0, %v521
    %v523 = vpop.f32.mrf.mxu0
    %v524 = vadd.f32 0.0, %v523
    %525 = vmatmul.bf16.gmra.mxu0 %v223
    %v526 = vpop.f32.mrf.mxu0
    %v527 = vadd.f32 0.0, %v526
    %v528 = vpop.f32.mrf.mxu0
    %v529 = vadd.f32 0.0, %v528
    %530 = vmatmul.bf16.gmra.mxu0 %v224
    %v531 = vpop.f32.mrf.mxu0
    %v532 = vadd.f32 0.0, %v531
    %v533 = vpop.f32.mrf.mxu0
    %v534 = vadd.f32 0.0, %v533
    %535 = vmatmul.bf16.gmra.mxu0 %v225
    %v536 = vpop.f32.mrf.mxu0
    %v537 = vadd.f32 0.0, %v536
    %v538 = vpop.f32.mrf.mxu0
    %v539 = vadd.f32 0.0, %v538
    %540 = vdwg.mxu0
    %541 = vmatpush.bf16.msra.mxu0 %v361
    %542 = vmatpush.bf16.msra.mxu0 %v357
    %543 = vmatpush.bf16.msra.mxu0 %v353
    %544 = vmatpush.bf16.msra.mxu0 %v349
    %545 = vmatpush.bf16.msra.mxu0 %v345
    %546 = vmatpush.bf16.msra.mxu0 %v341
    %547 = vmatpush.bf16.msra.mxu0 %v337
    %548 = vmatpush.bf16.msra.mxu0 %v333
    %549 = vmatmul.bf16.gmra.mxu0 %v218
    %v550 = vpop.f32.mrf.mxu0
    %v551 = vadd.f32 0.0, %v550
    %v552 = vpop.f32.mrf.mxu0
    %v553 = vadd.f32 0.0, %v552
    %554 = vmatmul.bf16.gmra.mxu0 %v219
    %v555 = vpop.f32.mrf.mxu0
    %v556 = vadd.f32 0.0, %v555
    %v557 = vpop.f32.mrf.mxu0
    %v558 = vadd.f32 0.0, %v557
    %559 = vmatmul.bf16.gmra.mxu0 %v220
    %v560 = vpop.f32.mrf.mxu0
    %v561 = vadd.f32 0.0, %v560
    %v562 = vpop.f32.mrf.mxu0
    %v563 = vadd.f32 0.0, %v562
    %564 = vmatmul.bf16.gmra.mxu0 %v221
    %v565 = vpop.f32.mrf.mxu0
    %v566 = vadd.f32 0.0, %v565
    %v567 = vpop.f32.mrf.mxu0
    %v568 = vadd.f32 0.0, %v567
    %569 = vmatmul.bf16.gmra.mxu0 %v222
    %v570 = vpop.f32.mrf.mxu0
    %v571 = vadd.f32 0.0, %v570
    %v572 = vpop.f32.mrf.mxu0
    %v573 = vadd.f32 0.0, %v572
    %574 = vmatmul.bf16.gmra.mxu0 %v223
    %v575 = vpop.f32.mrf.mxu0
    %v576 = vadd.f32 0.0, %v575
    %v577 = vpop.f32.mrf.mxu0
    %v578 = vadd.f32 0.0, %v577
    %579 = vmatmul.bf16.gmra.mxu0 %v224
    %v580 = vpop.f32.mrf.mxu0
    %v581 = vadd.f32 0.0, %v580
    %v582 = vpop.f32.mrf.mxu0
    %v583 = vadd.f32 0.0, %v582
    %584 = vmatmul.bf16.gmra.mxu0 %v225
    %v585 = vpop.f32.mrf.mxu0
    %v586 = vadd.f32 0.0, %v585
    %v587 = vpop.f32.mrf.mxu0
    %v588 = vadd.f32 0.0, %v587
    %589 = vdwg.mxu0
    %v590 = vadd.f32 %v404, %v406
    %v591 = vadd.f32 %v590, %v409
    %v592 = vadd.f32 %v591, %v411
    %v593 = vadd.f32 %v592, %v414
    %v594 = vadd.f32 %v593, %v416
    %v595 = vadd.f32 %v594, %v419
    %v596 = vadd.f32 %v595, %v421
    %v597 = vadd.f32 %v596, %v424
    %v598 = vadd.f32 %v597, %v426
    %v599 = vadd.f32 %v598, %v429
    %v600 = vadd.f32 %v599, %v431
    %v601 = vadd.f32 %v600, %v434
    %v602 = vadd.f32 %v601, %v436
    %v603 = vadd.f32 %v602, %v439
    %v604 = vadd.f32 %v603, %v441
    %v605 = vrot.slane %v604, 4
    %v606 = vadd.f32 %v604, %v605
    %v607 = vrot.slane %v606, 2
    %v608 = vadd.f32 %v606, %v607
    %v609 = vrot.slane %v608, 1
    %v610 = vadd.f32 %v608, %v609
    %v611 = vadd.f32 %v453, %v455
    %v612 = vadd.f32 %v611, %v458
    %v613 = vadd.f32 %v612, %v460
    %v614 = vadd.f32 %v613, %v463
    %v615 = vadd.f32 %v614, %v465
    %v616 = vadd.f32 %v615, %v468
    %v617 = vadd.f32 %v616, %v470
    %v618 = vadd.f32 %v617, %v473
    %v619 = vadd.f32 %v618, %v475
    %v620 = vadd.f32 %v619, %v478
    %v621 = vadd.f32 %v620, %v480
    %v622 = vadd.f32 %v621, %v483
    %v623 = vadd.f32 %v622, %v485
    %v624 = vadd.f32 %v623, %v488
    %v625 = vadd.f32 %v624, %v490
    %v626 = vrot.slane %v625, 4
    %v627 = vadd.f32 %v625, %v626
    %v628 = vrot.slane %v627, 2
    %v629 = vadd.f32 %v627, %v628
    %v630 = vrot.slane %v629, 1
    %v631 = vadd.f32 %v629, %v630
    %v632 = vadd.f32 %v502, %v504
    %v633 = vadd.f32 %v632, %v507
    %v634 = vadd.f32 %v633, %v509
    %v635 = vadd.f32 %v634, %v512
    %v636 = vadd.f32 %v635, %v514
    %v637 = vadd.f32 %v636, %v517
    %v638 = vadd.f32 %v637, %v519
    %v639 = vadd.f32 %v638, %v522
    %v640 = vadd.f32 %v639, %v524
    %v641 = vadd.f32 %v640, %v527
    %v642 = vadd.f32 %v641, %v529
    %v643 = vadd.f32 %v642, %v532
    %v644 = vadd.f32 %v643, %v534
    %v645 = vadd.f32 %v644, %v537
    %v646 = vadd.f32 %v645, %v539
    %v647 = vrot.slane %v646, 4
    %v648 = vadd.f32 %v646, %v647
    %v649 = vrot.slane %v648, 2
    %v650 = vadd.f32 %v648, %v649
    %v651 = vrot.slane %v650, 1
    %v652 = vadd.f32 %v650, %v651
    %v653 = vadd.f32 %v551, %v553
    %v654 = vadd.f32 %v653, %v556
    %v655 = vadd.f32 %v654, %v558
    %v656 = vadd.f32 %v655, %v561
    %v657 = vadd.f32 %v656, %v563
    %v658 = vadd.f32 %v657, %v566
    %v659 = vadd.f32 %v658, %v568
    %v660 = vadd.f32 %v659, %v571
    %v661 = vadd.f32 %v660, %v573
    %v662 = vadd.f32 %v661, %v576
    %v663 = vadd.f32 %v662, %v578
    %v664 = vadd.f32 %v663, %v581
    %v665 = vadd.f32 %v664, %v583
    %v666 = vadd.f32 %v665, %v586
    %v667 = vadd.f32 %v666, %v588
    %v668 = vrot.slane %v667, 4
    %v669 = vadd.f32 %v667, %v668
    %v670 = vrot.slane %v669, 2
    %v671 = vadd.f32 %v669, %v670
    %v672 = vrot.slane %v671, 1
    %v673 = vadd.f32 %v671, %v672
    %v674 = vmul.f32 %v610, 0.0078125
    %v675 = vmul.f32 %v631, 0.0078125
    %v676 = vmul.f32 %v652, 0.0078125
    %v677 = vmul.f32 %v673, 0.0078125
    %v678 = vmul.f32 %v404, %v404
    %v679 = vmul.f32 %v453, %v453
    %v680 = vmul.f32 %v502, %v502
    %v681 = vmul.f32 %v551, %v551
    %v682 = vmul.f32 %v406, %v406
    %v683 = vmul.f32 %v455, %v455
    %v684 = vmul.f32 %v504, %v504
    %v685 = vmul.f32 %v553, %v553
    %v686 = vmul.f32 %v409, %v409
    %v687 = vmul.f32 %v458, %v458
    %v688 = vmul.f32 %v507, %v507
    %v689 = vmul.f32 %v556, %v556
    %v690 = vmul.f32 %v411, %v411
    %v691 = vmul.f32 %v460, %v460
    %v692 = vmul.f32 %v509, %v509
    %v693 = vmul.f32 %v558, %v558
    %v694 = vmul.f32 %v414, %v414
    %v695 = vmul.f32 %v463, %v463
    %v696 = vmul.f32 %v512, %v512
    %v697 = vmul.f32 %v561, %v561
    %v698 = vmul.f32 %v416, %v416
    %v699 = vmul.f32 %v465, %v465
    %v700 = vmul.f32 %v514, %v514
    %v701 = vmul.f32 %v563, %v563
    %v702 = vmul.f32 %v419, %v419
    %v703 = vmul.f32 %v468, %v468
    %v704 = vmul.f32 %v517, %v517
    %v705 = vmul.f32 %v566, %v566
    %v706 = vmul.f32 %v421, %v421
    %v707 = vmul.f32 %v470, %v470
    %v708 = vmul.f32 %v519, %v519
    %v709 = vmul.f32 %v568, %v568
    %v710 = vmul.f32 %v424, %v424
    %v711 = vmul.f32 %v473, %v473
    %v712 = vmul.f32 %v522, %v522
    %v713 = vmul.f32 %v571, %v571
    %v714 = vmul.f32 %v426, %v426
    %v715 = vmul.f32 %v475, %v475
    %v716 = vmul.f32 %v524, %v524
    %v717 = vmul.f32 %v573, %v573
    %v718 = vmul.f32 %v429, %v429
    %v719 = vmul.f32 %v478, %v478
    %v720 = vmul.f32 %v527, %v527
    %v721 = vmul.f32 %v576, %v576
    %v722 = vmul.f32 %v431, %v431
    %v723 = vmul.f32 %v480, %v480
    %v724 = vmul.f32 %v529, %v529
    %v725 = vmul.f32 %v578, %v578
    %v726 = vmul.f32 %v434, %v434
    %v727 = vmul.f32 %v483, %v483
    %v728 = vmul.f32 %v532, %v532
    %v729 = vmul.f32 %v581, %v581
    %v730 = vmul.f32 %v436, %v436
    %v731 = vmul.f32 %v485, %v485
    %v732 = vmul.f32 %v534, %v534
    %v733 = vmul.f32 %v583, %v583
    %v734 = vmul.f32 %v439, %v439
    %v735 = vmul.f32 %v488, %v488
    %v736 = vmul.f32 %v537, %v537
    %v737 = vmul.f32 %v586, %v586
    %v738 = vmul.f32 %v441, %v441
    %v739 = vmul.f32 %v490, %v490
    %v740 = vmul.f32 %v539, %v539
    %v741 = vmul.f32 %v588, %v588
    %v742 = vadd.f32 %v678, %v682
    %v743 = vadd.f32 %v742, %v686
    %v744 = vadd.f32 %v743, %v690
    %v745 = vadd.f32 %v744, %v694
    %v746 = vadd.f32 %v745, %v698
    %v747 = vadd.f32 %v746, %v702
    %v748 = vadd.f32 %v747, %v706
    %v749 = vadd.f32 %v748, %v710
    %v750 = vadd.f32 %v749, %v714
    %v751 = vadd.f32 %v750, %v718
    %v752 = vadd.f32 %v751, %v722
    %v753 = vadd.f32 %v752, %v726
    %v754 = vadd.f32 %v753, %v730
    %v755 = vadd.f32 %v754, %v734
    %v756 = vadd.f32 %v755, %v738
    %v757 = vrot.slane %v756, 4
    %v758 = vadd.f32 %v756, %v757
    %v759 = vrot.slane %v758, 2
    %v760 = vadd.f32 %v758, %v759
    %v761 = vrot.slane %v760, 1
    %v762 = vadd.f32 %v760, %v761
    %v763 = vadd.f32 %v679, %v683
    %v764 = vadd.f32 %v763, %v687
    %v765 = vadd.f32 %v764, %v691
    %v766 = vadd.f32 %v765, %v695
    %v767 = vadd.f32 %v766, %v699
    %v768 = vadd.f32 %v767, %v703
    %v769 = vadd.f32 %v768, %v707
    %v770 = vadd.f32 %v769, %v711
    %v771 = vadd.f32 %v770, %v715
    %v772 = vadd.f32 %v771, %v719
    %v773 = vadd.f32 %v772, %v723
    %v774 = vadd.f32 %v773, %v727
    %v775 = vadd.f32 %v774, %v731
    %v776 = vadd.f32 %v775, %v735
    %v777 = vadd.f32 %v776, %v739
    %v778 = vrot.slane %v777, 4
    %v779 = vadd.f32 %v777, %v778
    %v780 = vrot.slane %v779, 2
    %v781 = vadd.f32 %v779, %v780
    %v782 = vrot.slane %v781, 1
    %v783 = vadd.f32 %v781, %v782
    %v784 = vadd.f32 %v680, %v684
    %v785 = vadd.f32 %v784, %v688
    %v786 = vadd.f32 %v785, %v692
    %v787 = vadd.f32 %v786, %v696
    %v788 = vadd.f32 %v787, %v700
    %v789 = vadd.f32 %v788, %v704
    %v790 = vadd.f32 %v789, %v708
    %v791 = vadd.f32 %v790, %v712
    %v792 = vadd.f32 %v791, %v716
    %v793 = vadd.f32 %v792, %v720
    %v794 = vadd.f32 %v793, %v724
    %v795 = vadd.f32 %v794, %v728
    %v796 = vadd.f32 %v795, %v732
    %v797 = vadd.f32 %v796, %v736
    %v798 = vadd.f32 %v797, %v740
    %v799 = vrot.slane %v798, 4
    %v800 = vadd.f32 %v798, %v799
    %v801 = vrot.slane %v800, 2
    %v802 = vadd.f32 %v800, %v801
    %v803 = vrot.slane %v802, 1
    %v804 = vadd.f32 %v802, %v803
    %v805 = vadd.f32 %v681, %v685
    %v806 = vadd.f32 %v805, %v689
    %v807 = vadd.f32 %v806, %v693
    %v808 = vadd.f32 %v807, %v697
    %v809 = vadd.f32 %v808, %v701
    %v810 = vadd.f32 %v809, %v705
    %v811 = vadd.f32 %v810, %v709
    %v812 = vadd.f32 %v811, %v713
    %v813 = vadd.f32 %v812, %v717
    %v814 = vadd.f32 %v813, %v721
    %v815 = vadd.f32 %v814, %v725
    %v816 = vadd.f32 %v815, %v729
    %v817 = vadd.f32 %v816, %v733
    %v818 = vadd.f32 %v817, %v737
    %v819 = vadd.f32 %v818, %v741
    %v820 = vrot.slane %v819, 4
    %v821 = vadd.f32 %v819, %v820
    %v822 = vrot.slane %v821, 2
    %v823 = vadd.f32 %v821, %v822
    %v824 = vrot.slane %v823, 1
    %v825 = vadd.f32 %v823, %v824
    %v826 = vmul.f32 %v762, 0.0078125
    %v827 = vmul.f32 %v783, 0.0078125
    %v828 = vmul.f32 %v804, 0.0078125
    %v829 = vmul.f32 %v825, 0.0078125
    %v830 = vmul.f32 %v674, %v674
    %v831 = vmul.f32 %v675, %v675
    %v832 = vmul.f32 %v676, %v676
    %v833 = vmul.f32 %v677, %v677
    %v834 = vsub.f32 %v826, %v830
    %v835 = vsub.f32 %v827, %v831
    %v836 = vsub.f32 %v828, %v832
    %v837 = vsub.f32 %v829, %v833
    %v838 = vadd.f32 %v834, 1e-05
    %v839 = vadd.f32 %v835, 1e-05
    %v840 = vadd.f32 %v836, 1e-05
    %v841 = vadd.f32 %v837, 1e-05
    %v842 = vrsqrt.pop %v838
    %v843 = vmul.f32 %v842, %v838
    %v844 = vmul.f32 %v843, %v842
    %v845 = vmul.f32 0.5, %v844
    %v846 = vsub.f32 1.5, %v845
    %v847 = vmul.f32 %v842, %v846
    %vm848 = vweird.f32 %v838
    %vm849 = vweird.f32 %v842
    %vm850 = vmor %vm848, %vm849
    %v851 = vsel %vm850, %v842, %v847
    %v852 = vrsqrt.pop %v839
    %v853 = vmul.f32 %v852, %v839
    %v854 = vmul.f32 %v853, %v852
    %v855 = vmul.f32 0.5, %v854
    %v856 = vsub.f32 1.5, %v855
    %v857 = vmul.f32 %v852, %v856
    %vm858 = vweird.f32 %v839
    %vm859 = vweird.f32 %v852
    %vm860 = vmor %vm858, %vm859
    %v861 = vsel %vm860, %v852, %v857
    %v862 = vrsqrt.pop %v840
    %v863 = vmul.f32 %v862, %v840
    %v864 = vmul.f32 %v863, %v862
    %v865 = vmul.f32 0.5, %v864
    %v866 = vsub.f32 1.5, %v865
    %v867 = vmul.f32 %v862, %v866
    %vm868 = vweird.f32 %v840
    %vm869 = vweird.f32 %v862
    %vm870 = vmor %vm868, %vm869
    %v871 = vsel %vm870, %v862, %v867
    %v872 = vrsqrt.pop %v841
    %v873 = vmul.f32 %v872, %v841
    %v874 = vmul.f32 %v873, %v872
    %v875 = vmul.f32 0.5, %v874
    %v876 = vsub.f32 1.5, %v875
    %v877 = vmul.f32 %v872, %v876
    %vm878 = vweird.f32 %v841
    %vm879 = vweird.f32 %v872
    %vm880 = vmor %vm878, %vm879
    %v881 = vsel %vm880, %v872, %v877
    %v882 = vld [vmem:[#allocation7] ss:$2 sm:$0xf]
    %v884 = vperm.slane %v882, 0
    %v885 = vperm.slane %v882, 1
    %v886 = vperm.slane %v882, 2
    %v887 = vperm.slane %v882, 3
    %v892 = vmul.f32 %v851, %v884
    %v893 = vmul.f32 %v861, %v885
    %v894 = vmul.f32 %v871, %v886
    %v895 = vmul.f32 %v881, %v887
    %s896 = scalar_lea.vmem [#allocation7], 1
    %v897 = vld [vmem:[%s896] ss:$2 sm:$0xf]
    %v898 = vmul.f32 %v674, %v892
    %v899 = vmul.f32 %v675, %v893
    %v900 = vmul.f32 %v676, %v894
    %v901 = vmul.f32 %v677, %v895
    %v906 = vrot.slane %v899, 7
    %v907 = vrot.slane %v900, 6
    %v908 = vrot.slane %v901, 5
    %vm909 = vcmask 1040384
    %v910 = vsel %vm909, %v898, %v906
    %vm911 = vcmask 1042434
    %v912 = vsel %vm911, %v907, %v908
    %vm913 = vcmask 1041408
    %v914 = vsel %vm913, %v910, %v912
    %v916 = vsub.f32 %v897, %v914
    %v917 = vperm.slane %v892, 0
    %v918 = vperm.slane %v893, 0
    %v919 = vperm.slane %v894, 0
    %v920 = vperm.slane %v895, 0
    %v921 = vmul.f32 %v404, %v917
    %v922 = vmul.f32 %v453, %v918
    %v923 = vmul.f32 %v502, %v919
    %v924 = vmul.f32 %v551, %v920
    %v925 = vmul.f32 %v406, %v917
    %v926 = vmul.f32 %v455, %v918
    %v927 = vmul.f32 %v504, %v919
    %v928 = vmul.f32 %v553, %v920
    %v929 = vmul.f32 %v409, %v917
    %v930 = vmul.f32 %v458, %v918
    %v931 = vmul.f32 %v507, %v919
    %v932 = vmul.f32 %v556, %v920
    %v933 = vmul.f32 %v411, %v917
    %v934 = vmul.f32 %v460, %v918
    %v935 = vmul.f32 %v509, %v919
    %v936 = vmul.f32 %v558, %v920
    %v937 = vmul.f32 %v414, %v917
    %v938 = vmul.f32 %v463, %v918
    %v939 = vmul.f32 %v512, %v919
    %v940 = vmul.f32 %v561, %v920
    %v941 = vmul.f32 %v416, %v917
    %v942 = vmul.f32 %v465, %v918
    %v943 = vmul.f32 %v514, %v919
    %v944 = vmul.f32 %v563, %v920
    %v945 = vmul.f32 %v419, %v917
    %v946 = vmul.f32 %v468, %v918
    %v947 = vmul.f32 %v517, %v919
    %v948 = vmul.f32 %v566, %v920
    %v949 = vmul.f32 %v421, %v917
    %v950 = vmul.f32 %v470, %v918
    %v951 = vmul.f32 %v519, %v919
    %v952 = vmul.f32 %v568, %v920
    %v953 = vmul.f32 %v424, %v917
    %v954 = vmul.f32 %v473, %v918
    %v955 = vmul.f32 %v522, %v919
    %v956 = vmul.f32 %v571, %v920
    %v957 = vmul.f32 %v426, %v917
    %v958 = vmul.f32 %v475, %v918
    %v959 = vmul.f32 %v524, %v919
    %v960 = vmul.f32 %v573, %v920
    %v961 = vmul.f32 %v429, %v917
    %v962 = vmul.f32 %v478, %v918
    %v963 = vmul.f32 %v527, %v919
    %v964 = vmul.f32 %v576, %v920
    %v965 = vmul.f32 %v431, %v917
    %v966 = vmul.f32 %v480, %v918
    %v967 = vmul.f32 %v529, %v919
    %v968 = vmul.f32 %v578, %v920
    %v969 = vmul.f32 %v434, %v917
    %v970 = vmul.f32 %v483, %v918
    %v971 = vmul.f32 %v532, %v919
    %v972 = vmul.f32 %v581, %v920
    %v973 = vmul.f32 %v436, %v917
    %v974 = vmul.f32 %v485, %v918
    %v975 = vmul.f32 %v534, %v919
    %v976 = vmul.f32 %v583, %v920
    %v977 = vmul.f32 %v439, %v917
    %v978 = vmul.f32 %v488, %v918
    %v979 = vmul.f32 %v537, %v919
    %v980 = vmul.f32 %v586, %v920
    %v981 = vmul.f32 %v441, %v917
    %v982 = vmul.f32 %v490, %v918
    %v983 = vmul.f32 %v539, %v919
    %v984 = vmul.f32 %v588, %v920
    %v986 = vperm.slane %v916, 0
    %v987 = vperm.slane %v916, 1
    %v988 = vperm.slane %v916, 2
    %v989 = vperm.slane %v916, 3
    %v994 = vadd.f32 %v921, %v986
    %v995 = vadd.f32 %v922, %v987
    %v996 = vadd.f32 %v923, %v988
    %v997 = vadd.f32 %v924, %v989
    %v998 = vadd.f32 %v925, %v986
    %v999 = vadd.f32 %v926, %v987
    %v1000 = vadd.f32 %v927, %v988
    %v1001 = vadd.f32 %v928, %v989
    %v1002 = vadd.f32 %v929, %v986
    %v1003 = vadd.f32 %v930, %v987
    %v1004 = vadd.f32 %v931, %v988
    %v1005 = vadd.f32 %v932, %v989
    %v1006 = vadd.f32 %v933, %v986
    %v1007 = vadd.f32 %v934, %v987
    %v1008 = vadd.f32 %v935, %v988
    %v1009 = vadd.f32 %v936, %v989
    %v1010 = vadd.f32 %v937, %v986
    %v1011 = vadd.f32 %v938, %v987
    %v1012 = vadd.f32 %v939, %v988
    %v1013 = vadd.f32 %v940, %v989
    %v1014 = vadd.f32 %v941, %v986
    %v1015 = vadd.f32 %v942, %v987
    %v1016 = vadd.f32 %v943, %v988
    %v1017 = vadd.f32 %v944, %v989
    %v1018 = vadd.f32 %v945, %v986
    %v1019 = vadd.f32 %v946, %v987
    %v1020 = vadd.f32 %v947, %v988
    %v1021 = vadd.f32 %v948, %v989
    %v1022 = vadd.f32 %v949, %v986
    %v1023 = vadd.f32 %v950, %v987
    %v1024 = vadd.f32 %v951, %v988
    %v1025 = vadd.f32 %v952, %v989
    %v1026 = vadd.f32 %v953, %v986
    %v1027 = vadd.f32 %v954, %v987
    %v1028 = vadd.f32 %v955, %v988
    %v1029 = vadd.f32 %v956, %v989
    %v1030 = vadd.f32 %v957, %v986
    %v1031 = vadd.f32 %v958, %v987
    %v1032 = vadd.f32 %v959, %v988
    %v1033 = vadd.f32 %v960, %v989
    %v1034 = vadd.f32 %v961, %v986
    %v1035 = vadd.f32 %v962, %v987
    %v1036 = vadd.f32 %v963, %v988
    %v1037 = vadd.f32 %v964, %v989
    %v1038 = vadd.f32 %v965, %v986
    %v1039 = vadd.f32 %v966, %v987
    %v1040 = vadd.f32 %v967, %v988
    %v1041 = vadd.f32 %v968, %v989
    %v1042 = vadd.f32 %v969, %v986
    %v1043 = vadd.f32 %v970, %v987
    %v1044 = vadd.f32 %v971, %v988
    %v1045 = vadd.f32 %v972, %v989
    %v1046 = vadd.f32 %v973, %v986
    %v1047 = vadd.f32 %v974, %v987
    %v1048 = vadd.f32 %v975, %v988
    %v1049 = vadd.f32 %v976, %v989
    %v1050 = vadd.f32 %v977, %v986
    %v1051 = vadd.f32 %v978, %v987
    %v1052 = vadd.f32 %v979, %v988
    %v1053 = vadd.f32 %v980, %v989
    %v1054 = vadd.f32 %v981, %v986
    %v1055 = vadd.f32 %v982, %v987
    %v1056 = vadd.f32 %v983, %v988
    %v1057 = vadd.f32 %v984, %v989
    %v1058 = vmax.f32 %v994, 0.0
    %v1059 = vmax.f32 %v995, 0.0
    %v1060 = vmax.f32 %v996, 0.0
    %v1061 = vmax.f32 %v997, 0.0
    %v1062 = vmax.f32 %v998, 0.0
    %v1063 = vmax.f32 %v999, 0.0
    %v1064 = vmax.f32 %v1000, 0.0
    %v1065 = vmax.f32 %v1001, 0.0
    %v1066 = vmax.f32 %v1002, 0.0
    %v1067 = vmax.f32 %v1003, 0.0
    %v1068 = vmax.f32 %v1004, 0.0
    %v1069 = vmax.f32 %v1005, 0.0
    %v1070 = vmax.f32 %v1006, 0.0
    %v1071 = vmax.f32 %v1007, 0.0
    %v1072 = vmax.f32 %v1008, 0.0
    %v1073 = vmax.f32 %v1009, 0.0
    %v1074 = vmax.f32 %v1010, 0.0
    %v1075 = vmax.f32 %v1011, 0.0
    %v1076 = vmax.f32 %v1012, 0.0
    %v1077 = vmax.f32 %v1013, 0.0
    %v1078 = vmax.f32 %v1014, 0.0
    %v1079 = vmax.f32 %v1015, 0.0
    %v1080 = vmax.f32 %v1016, 0.0
    %v1081 = vmax.f32 %v1017, 0.0
    %v1082 = vmax.f32 %v1018, 0.0
    %v1083 = vmax.f32 %v1019, 0.0
    %v1084 = vmax.f32 %v1020, 0.0
    %v1085 = vmax.f32 %v1021, 0.0
    %v1086 = vmax.f32 %v1022, 0.0
    %v1087 = vmax.f32 %v1023, 0.0
    %v1088 = vmax.f32 %v1024, 0.0
    %v1089 = vmax.f32 %v1025, 0.0
    %v1090 = vmax.f32 %v1026, 0.0
    %v1091 = vmax.f32 %v1027, 0.0
    %v1092 = vmax.f32 %v1028, 0.0
    %v1093 = vmax.f32 %v1029, 0.0
    %v1094 = vmax.f32 %v1030, 0.0
    %v1095 = vmax.f32 %v1031, 0.0
    %v1096 = vmax.f32 %v1032, 0.0
    %v1097 = vmax.f32 %v1033, 0.0
    %v1098 = vmax.f32 %v1034, 0.0
    %v1099 = vmax.f32 %v1035, 0.0
    %v1100 = vmax.f32 %v1036, 0.0
    %v1101 = vmax.f32 %v1037, 0.0
    %v1102 = vmax.f32 %v1038, 0.0
    %v1103 = vmax.f32 %v1039, 0.0
    %v1104 = vmax.f32 %v1040, 0.0
    %v1105 = vmax.f32 %v1041, 0.0
    %v1106 = vmax.f32 %v1042, 0.0
    %v1107 = vmax.f32 %v1043, 0.0
    %v1108 = vmax.f32 %v1044, 0.0
    %v1109 = vmax.f32 %v1045, 0.0
    %v1110 = vmax.f32 %v1046, 0.0
    %v1111 = vmax.f32 %v1047, 0.0
    %v1112 = vmax.f32 %v1048, 0.0
    %v1113 = vmax.f32 %v1049, 0.0
    %v1114 = vmax.f32 %v1050, 0.0
    %v1115 = vmax.f32 %v1051, 0.0
    %v1116 = vmax.f32 %v1052, 0.0
    %v1117 = vmax.f32 %v1053, 0.0
    %v1118 = vmax.f32 %v1054, 0.0
    %v1119 = vmax.f32 %v1055, 0.0
    %v1120 = vmax.f32 %v1056, 0.0
    %v1121 = vmax.f32 %v1057, 0.0
    %v1122 = vpack.c.bf16 %v1062, %v1058
    %v1123 = vpack.c.bf16 %v1063, %v1059
    %v1124 = vpack.c.bf16 %v1064, %v1060
    %v1125 = vpack.c.bf16 %v1065, %v1061
    %v1126 = vpack.c.bf16 %v1070, %v1066
    %v1127 = vpack.c.bf16 %v1071, %v1067
    %v1128 = vpack.c.bf16 %v1072, %v1068
    %v1129 = vpack.c.bf16 %v1073, %v1069
    %v1130 = vpack.c.bf16 %v1078, %v1074
    %v1131 = vpack.c.bf16 %v1079, %v1075
    %v1132 = vpack.c.bf16 %v1080, %v1076
    %v1133 = vpack.c.bf16 %v1081, %v1077
    %v1134 = vpack.c.bf16 %v1086, %v1082
    %v1135 = vpack.c.bf16 %v1087, %v1083
    %v1136 = vpack.c.bf16 %v1088, %v1084
    %v1137 = vpack.c.bf16 %v1089, %v1085
    %v1138 = vpack.c.bf16 %v1094, %v1090
    %v1139 = vpack.c.bf16 %v1095, %v1091
    %v1140 = vpack.c.bf16 %v1096, %v1092
    %v1141 = vpack.c.bf16 %v1097, %v1093
    %v1142 = vpack.c.bf16 %v1102, %v1098
    %v1143 = vpack.c.bf16 %v1103, %v1099
    %v1144 = vpack.c.bf16 %v1104, %v1100
    %v1145 = vpack.c.bf16 %v1105, %v1101
    %v1146 = vpack.c.bf16 %v1110, %v1106
    %v1147 = vpack.c.bf16 %v1111, %v1107
    %v1148 = vpack.c.bf16 %v1112, %v1108
    %v1149 = vpack.c.bf16 %v1113, %v1109
    %v1150 = vpack.c.bf16 %v1118, %v1114
    %v1151 = vpack.c.bf16 %v1119, %v1115
    %v1152 = vpack.c.bf16 %v1120, %v1116
    %v1153 = vpack.c.bf16 %v1121, %v1117
    %v1154 = vld [vmem:[#allocation8] sm:$0xff]
    %v1155 = vld [vmem:[#allocation8 + $0x8] sm:$0xff]
    %v1156 = vld [vmem:[#allocation8 + $0x10] sm:$0xff]
    %v1157 = vld [vmem:[#allocation8 + $0x18] sm:$0xff]
    %v1158 = vld [vmem:[#allocation8 + $0x20] sm:$0xff]
    %v1159 = vld [vmem:[#allocation8 + $0x28] sm:$0xff]
    %v1160 = vld [vmem:[#allocation8 + $0x30] sm:$0xff]
    %v1161 = vld [vmem:[#allocation8 + $0x38] sm:$0xff]
    %v1162 = vld [vmem:[#allocation8 + $0x40] sm:$0xff]
    %v1163 = vld [vmem:[#allocation8 + $0x48] sm:$0xff]
    %v1164 = vld [vmem:[#allocation8 + $0x50] sm:$0xff]
    %v1165 = vld [vmem:[#allocation8 + $0x58] sm:$0xff]
    %v1166 = vld [vmem:[#allocation8 + $0x60] sm:$0xff]
    %v1167 = vld [vmem:[#allocation8 + $0x68] sm:$0xff]
    %v1168 = vld [vmem:[#allocation8 + $0x70] sm:$0xff]
    %v1169 = vld [vmem:[#allocation8 + $0x78] sm:$0xff]
    %v1170 = vld [vmem:[#allocation8 + $0x80] sm:$0xff]
    %v1171 = vld [vmem:[#allocation8 + $0x88] sm:$0xff]
    %v1172 = vld [vmem:[#allocation8 + $0x90] sm:$0xff]
    %v1173 = vld [vmem:[#allocation8 + $0x98] sm:$0xff]
    %v1174 = vld [vmem:[#allocation8 + $0xa0] sm:$0xff]
    %v1175 = vld [vmem:[#allocation8 + $0xa8] sm:$0xff]
    %v1176 = vld [vmem:[#allocation8 + $0xb0] sm:$0xff]
    %v1177 = vld [vmem:[#allocation8 + $0xb8] sm:$0xff]
    %v1178 = vld [vmem:[#allocation8 + $0xc0] sm:$0xff]
    %v1179 = vld [vmem:[#allocation8 + $0xc8] sm:$0xff]
    %v1180 = vld [vmem:[#allocation8 + $0xd0] sm:$0xff]
    %v1181 = vld [vmem:[#allocation8 + $0xd8] sm:$0xff]
    %v1182 = vld [vmem:[#allocation8 + $0xe0] sm:$0xff]
    %v1183 = vld [vmem:[#allocation8 + $0xe8] sm:$0xff]
    %v1184 = vld [vmem:[#allocation8 + $0xf0] sm:$0xff]
    %v1185 = vld [vmem:[#allocation8 + $0xf8] sm:$0xff]
    %v1186 = vld [vmem:[#allocation8 + $0x100] sm:$0xff]
    %v1187 = vld [vmem:[#allocation8 + $0x108] sm:$0xff]
    %v1188 = vld [vmem:[#allocation8 + $0x110] sm:$0xff]
    %v1189 = vld [vmem:[#allocation8 + $0x118] sm:$0xff]
    %v1190 = vld [vmem:[#allocation8 + $0x120] sm:$0xff]
    %v1191 = vld [vmem:[#allocation8 + $0x128] sm:$0xff]
    %v1192 = vld [vmem:[#allocation8 + $0x130] sm:$0xff]
    %v1193 = vld [vmem:[#allocation8 + $0x138] sm:$0xff]
    %v1194 = vld [vmem:[#allocation8 + $0x140] sm:$0xff]
    %v1195 = vld [vmem:[#allocation8 + $0x148] sm:$0xff]
    %v1196 = vld [vmem:[#allocation8 + $0x150] sm:$0xff]
    %v1197 = vld [vmem:[#allocation8 + $0x158] sm:$0xff]
    %v1198 = vld [vmem:[#allocation8 + $0x160] sm:$0xff]
    %v1199 = vld [vmem:[#allocation8 + $0x168] sm:$0xff]
    %v1200 = vld [vmem:[#allocation8 + $0x170] sm:$0xff]
    %v1201 = vld [vmem:[#allocation8 + $0x178] sm:$0xff]
    %v1202 = vld [vmem:[#allocation8 + $0x180] sm:$0xff]
    %v1203 = vld [vmem:[#allocation8 + $0x188] sm:$0xff]
    %v1204 = vld [vmem:[#allocation8 + $0x190] sm:$0xff]
    %v1205 = vld [vmem:[#allocation8 + $0x198] sm:$0xff]
    %v1206 = vld [vmem:[#allocation8 + $0x1a0] sm:$0xff]
    %v1207 = vld [vmem:[#allocation8 + $0x1a8] sm:$0xff]
    %v1208 = vld [vmem:[#allocation8 + $0x1b0] sm:$0xff]
    %v1209 = vld [vmem:[#allocation8 + $0x1b8] sm:$0xff]
    %v1210 = vld [vmem:[#allocation8 + $0x1c0] sm:$0xff]
    %v1211 = vld [vmem:[#allocation8 + $0x1c8] sm:$0xff]
    %v1212 = vld [vmem:[#allocation8 + $0x1d0] sm:$0xff]
    %v1213 = vld [vmem:[#allocation8 + $0x1d8] sm:$0xff]
    %v1214 = vld [vmem:[#allocation8 + $0x1e0] sm:$0xff]
    %v1215 = vld [vmem:[#allocation8 + $0x1e8] sm:$0xff]
    %v1216 = vld [vmem:[#allocation8 + $0x1f0] sm:$0xff]
    %v1217 = vld [vmem:[#allocation8 + $0x1f8] sm:$0xff]
    %v1282 = vunpack.c.l.b16 %v1154
    %v1283 = vunpack.c.h.b16 %v1154
    %v1284 = vunpack.c.l.b16 %v1155
    %v1285 = vunpack.c.h.b16 %v1155
    %v1286 = vunpack.c.l.b16 %v1156
    %v1287 = vunpack.c.h.b16 %v1156
    %v1288 = vunpack.c.l.b16 %v1157
    %v1289 = vunpack.c.h.b16 %v1157
    %v1290 = vunpack.c.l.b16 %v1158
    %v1291 = vunpack.c.h.b16 %v1158
    %v1292 = vunpack.c.l.b16 %v1159
    %v1293 = vunpack.c.h.b16 %v1159
    %v1294 = vunpack.c.l.b16 %v1160
    %v1295 = vunpack.c.h.b16 %v1160
    %v1296 = vunpack.c.l.b16 %v1161
    %v1297 = vunpack.c.h.b16 %v1161
    %v1298 = vunpack.c.l.b16 %v1162
    %v1299 = vunpack.c.h.b16 %v1162
    %v1300 = vunpack.c.l.b16 %v1163
    %v1301 = vunpack.c.h.b16 %v1163
    %v1302 = vunpack.c.l.b16 %v1164
    %v1303 = vunpack.c.h.b16 %v1164
    %v1304 = vunpack.c.l.b16 %v1165
    %v1305 = vunpack.c.h.b16 %v1165
    %v1306 = vunpack.c.l.b16 %v1166
    %v1307 = vunpack.c.h.b16 %v1166
    %v1308 = vunpack.c.l.b16 %v1167
    %v1309 = vunpack.c.h.b16 %v1167
    %v1310 = vunpack.c.l.b16 %v1168
    %v1311 = vunpack.c.h.b16 %v1168
    %v1312 = vunpack.c.l.b16 %v1169
    %v1313 = vunpack.c.h.b16 %v1169
    %v1314 = vunpack.c.l.b16 %v1170
    %v1315 = vunpack.c.h.b16 %v1170
    %v1316 = vunpack.c.l.b16 %v1171
    %v1317 = vunpack.c.h.b16 %v1171
    %v1318 = vunpack.c.l.b16 %v1172
    %v1319 = vunpack.c.h.b16 %v1172
    %v1320 = vunpack.c.l.b16 %v1173
    %v1321 = vunpack.c.h.b16 %v1173
    %v1322 = vunpack.c.l.b16 %v1174
    %v1323 = vunpack.c.h.b16 %v1174
    %v1324 = vunpack.c.l.b16 %v1175
    %v1325 = vunpack.c.h.b16 %v1175
    %v1326 = vunpack.c.l.b16 %v1176
    %v1327 = vunpack.c.h.b16 %v1176
    %v1328 = vunpack.c.l.b16 %v1177
    %v1329 = vunpack.c.h.b16 %v1177
    %v1330 = vunpack.c.l.b16 %v1178
    %v1331 = vunpack.c.h.b16 %v1178
    %v1332 = vunpack.c.l.b16 %v1179
    %v1333 = vunpack.c.h.b16 %v1179
    %v1334 = vunpack.c.l.b16 %v1180
    %v1335 = vunpack.c.h.b16 %v1180
    %v1336 = vunpack.c.l.b16 %v1181
    %v1337 = vunpack.c.h.b16 %v1181
    %v1338 = vunpack.c.l.b16 %v1182
    %v1339 = vunpack.c.h.b16 %v1182
    %v1340 = vunpack.c.l.b16 %v1183
    %v1341 = vunpack.c.h.b16 %v1183
    %v1342 = vunpack.c.l.b16 %v1184
    %v1343 = vunpack.c.h.b16 %v1184
    %v1344 = vunpack.c.l.b16 %v1185
    %v1345 = vunpack.c.h.b16 %v1185
    %v1346 = vunpack.c.l.b16 %v1186
    %v1347 = vunpack.c.h.b16 %v1186
    %v1348 = vunpack.c.l.b16 %v1187
    %v1349 = vunpack.c.h.b16 %v1187
    %v1350 = vunpack.c.l.b16 %v1188
    %v1351 = vunpack.c.h.b16 %v1188
    %v1352 = vunpack.c.l.b16 %v1189
    %v1353 = vunpack.c.h.b16 %v1189
    %v1354 = vunpack.c.l.b16 %v1190
    %v1355 = vunpack.c.h.b16 %v1190
    %v1356 = vunpack.c.l.b16 %v1191
    %v1357 = vunpack.c.h.b16 %v1191
    %v1358 = vunpack.c.l.b16 %v1192
    %v1359 = vunpack.c.h.b16 %v1192
    %v1360 = vunpack.c.l.b16 %v1193
    %v1361 = vunpack.c.h.b16 %v1193
    %v1362 = vunpack.c.l.b16 %v1194
    %v1363 = vunpack.c.h.b16 %v1194
    %v1364 = vunpack.c.l.b16 %v1195
    %v1365 = vunpack.c.h.b16 %v1195
    %v1366 = vunpack.c.l.b16 %v1196
    %v1367 = vunpack.c.h.b16 %v1196
    %v1368 = vunpack.c.l.b16 %v1197
    %v1369 = vunpack.c.h.b16 %v1197
    %v1370 = vunpack.c.l.b16 %v1198
    %v1371 = vunpack.c.h.b16 %v1198
    %v1372 = vunpack.c.l.b16 %v1199
    %v1373 = vunpack.c.h.b16 %v1199
    %v1374 = vunpack.c.l.b16 %v1200
    %v1375 = vunpack.c.h.b16 %v1200
    %v1376 = vunpack.c.l.b16 %v1201
    %v1377 = vunpack.c.h.b16 %v1201
    %v1378 = vunpack.c.l.b16 %v1202
    %v1379 = vunpack.c.h.b16 %v1202
    %v1380 = vunpack.c.l.b16 %v1203
    %v1381 = vunpack.c.h.b16 %v1203
    %v1382 = vunpack.c.l.b16 %v1204
    %v1383 = vunpack.c.h.b16 %v1204
    %v1384 = vunpack.c.l.b16 %v1205
    %v1385 = vunpack.c.h.b16 %v1205
    %v1386 = vunpack.c.l.b16 %v1206
    %v1387 = vunpack.c.h.b16 %v1206
    %v1388 = vunpack.c.l.b16 %v1207
    %v1389 = vunpack.c.h.b16 %v1207
    %v1390 = vunpack.c.l.b16 %v1208
    %v1391 = vunpack.c.h.b16 %v1208
    %v1392 = vunpack.c.l.b16 %v1209
    %v1393 = vunpack.c.h.b16 %v1209
    %v1394 = vunpack.c.l.b16 %v1210
    %v1395 = vunpack.c.h.b16 %v1210
    %v1396 = vunpack.c.l.b16 %v1211
    %v1397 = vunpack.c.h.b16 %v1211
    %v1398 = vunpack.c.l.b16 %v1212
    %v1399 = vunpack.c.h.b16 %v1212
    %v1400 = vunpack.c.l.b16 %v1213
    %v1401 = vunpack.c.h.b16 %v1213
    %v1402 = vunpack.c.l.b16 %v1214
    %v1403 = vunpack.c.h.b16 %v1214
    %v1404 = vunpack.c.l.b16 %v1215
    %v1405 = vunpack.c.h.b16 %v1215
    %v1406 = vunpack.c.l.b16 %v1216
    %v1407 = vunpack.c.h.b16 %v1216
    %v1408 = vunpack.c.l.b16 %v1217
    %v1409 = vunpack.c.h.b16 %v1217
    %v1410 = vpack.c.b16 %v1284, %v1282
    %v1411 = vpack.c.b16 %v1285, %v1283
    %v1412 = vpack.c.b16 %v1288, %v1286
    %v1413 = vpack.c.b16 %v1289, %v1287
    %v1414 = vpack.c.b16 %v1292, %v1290
    %v1415 = vpack.c.b16 %v1293, %v1291
    %v1416 = vpack.c.b16 %v1296, %v1294
    %v1417 = vpack.c.b16 %v1297, %v1295
    %v1418 = vpack.c.b16 %v1300, %v1298
    %v1419 = vpack.c.b16 %v1301, %v1299
    %v1420 = vpack.c.b16 %v1304, %v1302
    %v1421 = vpack.c.b16 %v1305, %v1303
    %v1422 = vpack.c.b16 %v1308, %v1306
    %v1423 = vpack.c.b16 %v1309, %v1307
    %v1424 = vpack.c.b16 %v1312, %v1310
    %v1425 = vpack.c.b16 %v1313, %v1311
    %v1426 = vpack.c.b16 %v1316, %v1314
    %v1427 = vpack.c.b16 %v1317, %v1315
    %v1428 = vpack.c.b16 %v1320, %v1318
    %v1429 = vpack.c.b16 %v1321, %v1319
    %v1430 = vpack.c.b16 %v1324, %v1322
    %v1431 = vpack.c.b16 %v1325, %v1323
    %v1432 = vpack.c.b16 %v1328, %v1326
    %v1433 = vpack.c.b16 %v1329, %v1327
    %v1434 = vpack.c.b16 %v1332, %v1330
    %v1435 = vpack.c.b16 %v1333, %v1331
    %v1436 = vpack.c.b16 %v1336, %v1334
    %v1437 = vpack.c.b16 %v1337, %v1335
    %v1438 = vpack.c.b16 %v1340, %v1338
    %v1439 = vpack.c.b16 %v1341, %v1339
    %v1440 = vpack.c.b16 %v1344, %v1342
    %v1441 = vpack.c.b16 %v1345, %v1343
    %v1442 = vpack.c.b16 %v1348, %v1346
    %v1443 = vpack.c.b16 %v1349, %v1347
    %v1444 = vpack.c.b16 %v1352, %v1350
    %v1445 = vpack.c.b16 %v1353, %v1351
    %v1446 = vpack.c.b16 %v1356, %v1354
    %v1447 = vpack.c.b16 %v1357, %v1355
    %v1448 = vpack.c.b16 %v1360, %v1358
    %v1449 = vpack.c.b16 %v1361, %v1359
    %v1450 = vpack.c.b16 %v1364, %v1362
    %v1451 = vpack.c.b16 %v1365, %v1363
    %v1452 = vpack.c.b16 %v1368, %v1366
    %v1453 = vpack.c.b16 %v1369, %v1367
    %v1454 = vpack.c.b16 %v1372, %v1370
    %v1455 = vpack.c.b16 %v1373, %v1371
    %v1456 = vpack.c.b16 %v1376, %v1374
    %v1457 = vpack.c.b16 %v1377, %v1375
    %v1458 = vpack.c.b16 %v1380, %v1378
    %v1459 = vpack.c.b16 %v1381, %v1379
    %v1460 = vpack.c.b16 %v1384, %v1382
    %v1461 = vpack.c.b16 %v1385, %v1383
    %v1462 = vpack.c.b16 %v1388, %v1386
    %v1463 = vpack.c.b16 %v1389, %v1387
    %v1464 = vpack.c.b16 %v1392, %v1390
    %v1465 = vpack.c.b16 %v1393, %v1391
    %v1466 = vpack.c.b16 %v1396, %v1394
    %v1467 = vpack.c.b16 %v1397, %v1395
    %v1468 = vpack.c.b16 %v1400, %v1398
    %v1469 = vpack.c.b16 %v1401, %v1399
    %v1470 = vpack.c.b16 %v1404, %v1402
    %v1471 = vpack.c.b16 %v1405, %v1403
    %v1472 = vpack.c.b16 %v1408, %v1406
    %v1473 = vpack.c.b16 %v1409, %v1407
    %1538 = vmatpush.bf16.msra.mxu0 %v1424
    %1539 = vmatpush.bf16.msra.mxu0 %v1422
    %1540 = vmatpush.bf16.msra.mxu0 %v1420
    %1541 = vmatpush.bf16.msra.mxu0 %v1418
    %1542 = vmatpush.bf16.msra.mxu0 %v1416
    %1543 = vmatpush.bf16.msra.mxu0 %v1414
    %1544 = vmatpush.bf16.msra.mxu0 %v1412
    %1545 = vmatpush.bf16.msra.mxu0 %v1410
    %1546 = vmatmul.bf16.gmra.mxu0 %v1122
    %v1547 = vpop.f32.mrf.mxu0
    %v1548 = vadd.f32 0.0, %v1547
    %v1549 = vpop.f32.mrf.mxu0
    %v1550 = vadd.f32 0.0, %v1549
    %1551 = vmatmul.bf16.gmra.mxu0 %v1126
    %v1552 = vpop.f32.mrf.mxu0
    %v1553 = vadd.f32 0.0, %v1552
    %v1554 = vpop.f32.mrf.mxu0
    %v1555 = vadd.f32 0.0, %v1554
    %1556 = vmatmul.bf16.gmra.mxu0 %v1130
    %v1557 = vpop.f32.mrf.mxu0
    %v1558 = vadd.f32 0.0, %v1557
    %v1559 = vpop.f32.mrf.mxu0
    %v1560 = vadd.f32 0.0, %v1559
    %1561 = vmatmul.bf16.gmra.mxu0 %v1134
    %v1562 = vpop.f32.mrf.mxu0
    %v1563 = vadd.f32 0.0, %v1562
    %v1564 = vpop.f32.mrf.mxu0
    %v1565 = vadd.f32 0.0, %v1564
    %1566 = vmatmul.bf16.gmra.mxu0 %v1138
    %v1567 = vpop.f32.mrf.mxu0
    %v1568 = vadd.f32 0.0, %v1567
    %v1569 = vpop.f32.mrf.mxu0
    %v1570 = vadd.f32 0.0, %v1569
    %1571 = vmatmul.bf16.gmra.mxu0 %v1142
    %v1572 = vpop.f32.mrf.mxu0
    %v1573 = vadd.f32 0.0, %v1572
    %v1574 = vpop.f32.mrf.mxu0
    %v1575 = vadd.f32 0.0, %v1574
    %1576 = vmatmul.bf16.gmra.mxu0 %v1146
    %v1577 = vpop.f32.mrf.mxu0
    %v1578 = vadd.f32 0.0, %v1577
    %v1579 = vpop.f32.mrf.mxu0
    %v1580 = vadd.f32 0.0, %v1579
    %1581 = vmatmul.bf16.gmra.mxu0 %v1150
    %v1582 = vpop.f32.mrf.mxu0
    %v1583 = vadd.f32 0.0, %v1582
    %v1584 = vpop.f32.mrf.mxu0
    %v1585 = vadd.f32 0.0, %v1584
    %1586 = vdwg.mxu0
    %1587 = vmatpush.bf16.msra.mxu0 %v1440
    %1588 = vmatpush.bf16.msra.mxu0 %v1438
    %1589 = vmatpush.bf16.msra.mxu0 %v1436
    %1590 = vmatpush.bf16.msra.mxu0 %v1434
    %1591 = vmatpush.bf16.msra.mxu0 %v1432
    %1592 = vmatpush.bf16.msra.mxu0 %v1430
    %1593 = vmatpush.bf16.msra.mxu0 %v1428
    %1594 = vmatpush.bf16.msra.mxu0 %v1426
    %1595 = vmatmul.bf16.gmra.mxu0 %v1123
    %v1596 = vpop.f32.mrf.mxu0
    %v1597 = vadd.f32 %v1548, %v1596
    %v1598 = vpop.f32.mrf.mxu0
    %v1599 = vadd.f32 %v1550, %v1598
    %1600 = vmatmul.bf16.gmra.mxu0 %v1127
    %v1601 = vpop.f32.mrf.mxu0
    %v1602 = vadd.f32 %v1553, %v1601
    %v1603 = vpop.f32.mrf.mxu0
    %v1604 = vadd.f32 %v1555, %v1603
    %1605 = vmatmul.bf16.gmra.mxu0 %v1131
    %v1606 = vpop.f32.mrf.mxu0
    %v1607 = vadd.f32 %v1558, %v1606
    %v1608 = vpop.f32.mrf.mxu0
    %v1609 = vadd.f32 %v1560, %v1608
    %1610 = vmatmul.bf16.gmra.mxu0 %v1135
    %v1611 = vpop.f32.mrf.mxu0
    %v1612 = vadd.f32 %v1563, %v1611
    %v1613 = vpop.f32.mrf.mxu0
    %v1614 = vadd.f32 %v1565, %v1613
    %1615 = vmatmul.bf16.gmra.mxu0 %v1139
    %v1616 = vpop.f32.mrf.mxu0
    %v1617 = vadd.f32 %v1568, %v1616
    %v1618 = vpop.f32.mrf.mxu0
    %v1619 = vadd.f32 %v1570, %v1618
    %1620 = vmatmul.bf16.gmra.mxu0 %v1143
    %v1621 = vpop.f32.mrf.mxu0
    %v1622 = vadd.f32 %v1573, %v1621
    %v1623 = vpop.f32.mrf.mxu0
    %v1624 = vadd.f32 %v1575, %v1623
    %1625 = vmatmul.bf16.gmra.mxu0 %v1147
    %v1626 = vpop.f32.mrf.mxu0
    %v1627 = vadd.f32 %v1578, %v1626
    %v1628 = vpop.f32.mrf.mxu0
    %v1629 = vadd.f32 %v1580, %v1628
    %1630 = vmatmul.bf16.gmra.mxu0 %v1151
    %v1631 = vpop.f32.mrf.mxu0
    %v1632 = vadd.f32 %v1583, %v1631
    %v1633 = vpop.f32.mrf.mxu0
    %v1634 = vadd.f32 %v1585, %v1633
    %1635 = vdwg.mxu0
    %1636 = vmatpush.bf16.msra.mxu0 %v1456
    %1637 = vmatpush.bf16.msra.mxu0 %v1454
    %1638 = vmatpush.bf16.msra.mxu0 %v1452
    %1639 = vmatpush.bf16.msra.mxu0 %v1450
    %1640 = vmatpush.bf16.msra.mxu0 %v1448
    %1641 = vmatpush.bf16.msra.mxu0 %v1446
    %1642 = vmatpush.bf16.msra.mxu0 %v1444
    %1643 = vmatpush.bf16.msra.mxu0 %v1442
    %1644 = vmatmul.bf16.gmra.mxu0 %v1124
    %v1645 = vpop.f32.mrf.mxu0
    %v1646 = vadd.f32 %v1597, %v1645
    %v1647 = vpop.f32.mrf.mxu0
    %v1648 = vadd.f32 %v1599, %v1647
    %1649 = vmatmul.bf16.gmra.mxu0 %v1128
    %v1650 = vpop.f32.mrf.mxu0
    %v1651 = vadd.f32 %v1602, %v1650
    %v1652 = vpop.f32.mrf.mxu0
    %v1653 = vadd.f32 %v1604, %v1652
    %1654 = vmatmul.bf16.gmra.mxu0 %v1132
    %v1655 = vpop.f32.mrf.mxu0
    %v1656 = vadd.f32 %v1607, %v1655
    %v1657 = vpop.f32.mrf.mxu0
    %v1658 = vadd.f32 %v1609, %v1657
    %1659 = vmatmul.bf16.gmra.mxu0 %v1136
    %v1660 = vpop.f32.mrf.mxu0
    %v1661 = vadd.f32 %v1612, %v1660
    %v1662 = vpop.f32.mrf.mxu0
    %v1663 = vadd.f32 %v1614, %v1662
    %1664 = vmatmul.bf16.gmra.mxu0 %v1140
    %v1665 = vpop.f32.mrf.mxu0
    %v1666 = vadd.f32 %v1617, %v1665
    %v1667 = vpop.f32.mrf.mxu0
    %v1668 = vadd.f32 %v1619, %v1667
    %1669 = vmatmul.bf16.gmra.mxu0 %v1144
    %v1670 = vpop.f32.mrf.mxu0
    %v1671 = vadd.f32 %v1622, %v1670
    %v1672 = vpop.f32.mrf.mxu0
    %v1673 = vadd.f32 %v1624, %v1672
    %1674 = vmatmul.bf16.gmra.mxu0 %v1148
    %v1675 = vpop.f32.mrf.mxu0
    %v1676 = vadd.f32 %v1627, %v1675
    %v1677 = vpop.f32.mrf.mxu0
    %v1678 = vadd.f32 %v1629, %v1677
    %1679 = vmatmul.bf16.gmra.mxu0 %v1152
    %v1680 = vpop.f32.mrf.mxu0
    %v1681 = vadd.f32 %v1632, %v1680
    %v1682 = vpop.f32.mrf.mxu0
    %v1683 = vadd.f32 %v1634, %v1682
    %1684 = vdwg.mxu0
    %1685 = vmatpush.bf16.msra.mxu0 %v1472
    %1686 = vmatpush.bf16.msra.mxu0 %v1470
    %1687 = vmatpush.bf16.msra.mxu0 %v1468
    %1688 = vmatpush.bf16.msra.mxu0 %v1466
    %1689 = vmatpush.bf16.msra.mxu0 %v1464
    %1690 = vmatpush.bf16.msra.mxu0 %v1462
    %1691 = vmatpush.bf16.msra.mxu0 %v1460
    %1692 = vmatpush.bf16.msra.mxu0 %v1458
    %1693 = vmatmul.bf16.gmra.mxu0 %v1125
    %v1694 = vpop.f32.mrf.mxu0
    %v1695 = vadd.f32 %v1646, %v1694
    %v1696 = vpop.f32.mrf.mxu0
    %v1697 = vadd.f32 %v1648, %v1696
    %1698 = vmatmul.bf16.gmra.mxu0 %v1129
    %v1699 = vpop.f32.mrf.mxu0
    %v1700 = vadd.f32 %v1651, %v1699
    %v1701 = vpop.f32.mrf.mxu0
    %v1702 = vadd.f32 %v1653, %v1701
    %1703 = vmatmul.bf16.gmra.mxu0 %v1133
    %v1704 = vpop.f32.mrf.mxu0
    %v1705 = vadd.f32 %v1656, %v1704
    %v1706 = vpop.f32.mrf.mxu0
    %v1707 = vadd.f32 %v1658, %v1706
    %1708 = vmatmul.bf16.gmra.mxu0 %v1137
    %v1709 = vpop.f32.mrf.mxu0
    %v1710 = vadd.f32 %v1661, %v1709
    %v1711 = vpop.f32.mrf.mxu0
    %v1712 = vadd.f32 %v1663, %v1711
    %1713 = vmatmul.bf16.gmra.mxu0 %v1141
    %v1714 = vpop.f32.mrf.mxu0
    %v1715 = vadd.f32 %v1666, %v1714
    %v1716 = vpop.f32.mrf.mxu0
    %v1717 = vadd.f32 %v1668, %v1716
    %1718 = vmatmul.bf16.gmra.mxu0 %v1145
    %v1719 = vpop.f32.mrf.mxu0
    %v1720 = vadd.f32 %v1671, %v1719
    %v1721 = vpop.f32.mrf.mxu0
    %v1722 = vadd.f32 %v1673, %v1721
    %1723 = vmatmul.bf16.gmra.mxu0 %v1149
    %v1724 = vpop.f32.mrf.mxu0
    %v1725 = vadd.f32 %v1676, %v1724
    %v1726 = vpop.f32.mrf.mxu0
    %v1727 = vadd.f32 %v1678, %v1726
    %1728 = vmatmul.bf16.gmra.mxu0 %v1153
    %v1729 = vpop.f32.mrf.mxu0
    %v1730 = vadd.f32 %v1681, %v1729
    %v1731 = vpop.f32.mrf.mxu0
    %v1732 = vadd.f32 %v1683, %v1731
    %1733 = vdwg.mxu0
    %1734 = vmatpush.bf16.msra.mxu0 %v1425
    %1735 = vmatpush.bf16.msra.mxu0 %v1423
    %1736 = vmatpush.bf16.msra.mxu0 %v1421
    %1737 = vmatpush.bf16.msra.mxu0 %v1419
    %1738 = vmatpush.bf16.msra.mxu0 %v1417
    %1739 = vmatpush.bf16.msra.mxu0 %v1415
    %1740 = vmatpush.bf16.msra.mxu0 %v1413
    %1741 = vmatpush.bf16.msra.mxu0 %v1411
    %1742 = vmatmul.bf16.gmra.mxu0 %v1122
    %v1743 = vpop.f32.mrf.mxu0
    %v1744 = vadd.f32 0.0, %v1743
    %v1745 = vpop.f32.mrf.mxu0
    %v1746 = vadd.f32 0.0, %v1745
    %1747 = vmatmul.bf16.gmra.mxu0 %v1126
    %v1748 = vpop.f32.mrf.mxu0
    %v1749 = vadd.f32 0.0, %v1748
    %v1750 = vpop.f32.mrf.mxu0
    %v1751 = vadd.f32 0.0, %v1750
    %1752 = vmatmul.bf16.gmra.mxu0 %v1130
    %v1753 = vpop.f32.mrf.mxu0
    %v1754 = vadd.f32 0.0, %v1753
    %v1755 = vpop.f32.mrf.mxu0
    %v1756 = vadd.f32 0.0, %v1755
    %1757 = vmatmul.bf16.gmra.mxu0 %v1134
    %v1758 = vpop.f32.mrf.mxu0
    %v1759 = vadd.f32 0.0, %v1758
    %v1760 = vpop.f32.mrf.mxu0
    %v1761 = vadd.f32 0.0, %v1760
    %1762 = vmatmul.bf16.gmra.mxu0 %v1138
    %v1763 = vpop.f32.mrf.mxu0
    %v1764 = vadd.f32 0.0, %v1763
    %v1765 = vpop.f32.mrf.mxu0
    %v1766 = vadd.f32 0.0, %v1765
    %1767 = vmatmul.bf16.gmra.mxu0 %v1142
    %v1768 = vpop.f32.mrf.mxu0
    %v1769 = vadd.f32 0.0, %v1768
    %v1770 = vpop.f32.mrf.mxu0
    %v1771 = vadd.f32 0.0, %v1770
    %1772 = vmatmul.bf16.gmra.mxu0 %v1146
    %v1773 = vpop.f32.mrf.mxu0
    %v1774 = vadd.f32 0.0, %v1773
    %v1775 = vpop.f32.mrf.mxu0
    %v1776 = vadd.f32 0.0, %v1775
    %1777 = vmatmul.bf16.gmra.mxu0 %v1150
    %v1778 = vpop.f32.mrf.mxu0
    %v1779 = vadd.f32 0.0, %v1778
    %v1780 = vpop.f32.mrf.mxu0
    %v1781 = vadd.f32 0.0, %v1780
    %1782 = vdwg.mxu0
    %1783 = vmatpush.bf16.msra.mxu0 %v1441
    %1784 = vmatpush.bf16.msra.mxu0 %v1439
    %1785 = vmatpush.bf16.msra.mxu0 %v1437
    %1786 = vmatpush.bf16.msra.mxu0 %v1435
    %1787 = vmatpush.bf16.msra.mxu0 %v1433
    %1788 = vmatpush.bf16.msra.mxu0 %v1431
    %1789 = vmatpush.bf16.msra.mxu0 %v1429
    %1790 = vmatpush.bf16.msra.mxu0 %v1427
    %1791 = vmatmul.bf16.gmra.mxu0 %v1123
    %v1792 = vpop.f32.mrf.mxu0
    %v1793 = vadd.f32 %v1744, %v1792
    %v1794 = vpop.f32.mrf.mxu0
    %v1795 = vadd.f32 %v1746, %v1794
    %1796 = vmatmul.bf16.gmra.mxu0 %v1127
    %v1797 = vpop.f32.mrf.mxu0
    %v1798 = vadd.f32 %v1749, %v1797
    %v1799 = vpop.f32.mrf.mxu0
    %v1800 = vadd.f32 %v1751, %v1799
    %1801 = vmatmul.bf16.gmra.mxu0 %v1131
    %v1802 = vpop.f32.mrf.mxu0
    %v1803 = vadd.f32 %v1754, %v1802
    %v1804 = vpop.f32.mrf.mxu0
    %v1805 = vadd.f32 %v1756, %v1804
    %1806 = vmatmul.bf16.gmra.mxu0 %v1135
    %v1807 = vpop.f32.mrf.mxu0
    %v1808 = vadd.f32 %v1759, %v1807
    %v1809 = vpop.f32.mrf.mxu0
    %v1810 = vadd.f32 %v1761, %v1809
    %1811 = vmatmul.bf16.gmra.mxu0 %v1139
    %v1812 = vpop.f32.mrf.mxu0
    %v1813 = vadd.f32 %v1764, %v1812
    %v1814 = vpop.f32.mrf.mxu0
    %v1815 = vadd.f32 %v1766, %v1814
    %1816 = vmatmul.bf16.gmra.mxu0 %v1143
    %v1817 = vpop.f32.mrf.mxu0
    %v1818 = vadd.f32 %v1769, %v1817
    %v1819 = vpop.f32.mrf.mxu0
    %v1820 = vadd.f32 %v1771, %v1819
    %1821 = vmatmul.bf16.gmra.mxu0 %v1147
    %v1822 = vpop.f32.mrf.mxu0
    %v1823 = vadd.f32 %v1774, %v1822
    %v1824 = vpop.f32.mrf.mxu0
    %v1825 = vadd.f32 %v1776, %v1824
    %1826 = vmatmul.bf16.gmra.mxu0 %v1151
    %v1827 = vpop.f32.mrf.mxu0
    %v1828 = vadd.f32 %v1779, %v1827
    %v1829 = vpop.f32.mrf.mxu0
    %v1830 = vadd.f32 %v1781, %v1829
    %1831 = vdwg.mxu0
    %1832 = vmatpush.bf16.msra.mxu0 %v1457
    %1833 = vmatpush.bf16.msra.mxu0 %v1455
    %1834 = vmatpush.bf16.msra.mxu0 %v1453
    %1835 = vmatpush.bf16.msra.mxu0 %v1451
    %1836 = vmatpush.bf16.msra.mxu0 %v1449
    %1837 = vmatpush.bf16.msra.mxu0 %v1447
    %1838 = vmatpush.bf16.msra.mxu0 %v1445
    %1839 = vmatpush.bf16.msra.mxu0 %v1443
    %1840 = vmatmul.bf16.gmra.mxu0 %v1124
    %v1841 = vpop.f32.mrf.mxu0
    %v1842 = vadd.f32 %v1793, %v1841
    %v1843 = vpop.f32.mrf.mxu0
    %v1844 = vadd.f32 %v1795, %v1843
    %1845 = vmatmul.bf16.gmra.mxu0 %v1128
    %v1846 = vpop.f32.mrf.mxu0
    %v1847 = vadd.f32 %v1798, %v1846
    %v1848 = vpop.f32.mrf.mxu0
    %v1849 = vadd.f32 %v1800, %v1848
    %1850 = vmatmul.bf16.gmra.mxu0 %v1132
    %v1851 = vpop.f32.mrf.mxu0
    %v1852 = vadd.f32 %v1803, %v1851
    %v1853 = vpop.f32.mrf.mxu0
    %v1854 = vadd.f32 %v1805, %v1853
    %1855 = vmatmul.bf16.gmra.mxu0 %v1136
    %v1856 = vpop.f32.mrf.mxu0
    %v1857 = vadd.f32 %v1808, %v1856
    %v1858 = vpop.f32.mrf.mxu0
    %v1859 = vadd.f32 %v1810, %v1858
    %1860 = vmatmul.bf16.gmra.mxu0 %v1140
    %v1861 = vpop.f32.mrf.mxu0
    %v1862 = vadd.f32 %v1813, %v1861
    %v1863 = vpop.f32.mrf.mxu0
    %v1864 = vadd.f32 %v1815, %v1863
    %1865 = vmatmul.bf16.gmra.mxu0 %v1144
    %v1866 = vpop.f32.mrf.mxu0
    %v1867 = vadd.f32 %v1818, %v1866
    %v1868 = vpop.f32.mrf.mxu0
    %v1869 = vadd.f32 %v1820, %v1868
    %1870 = vmatmul.bf16.gmra.mxu0 %v1148
    %v1871 = vpop.f32.mrf.mxu0
    %v1872 = vadd.f32 %v1823, %v1871
    %v1873 = vpop.f32.mrf.mxu0
    %v1874 = vadd.f32 %v1825, %v1873
    %1875 = vmatmul.bf16.gmra.mxu0 %v1152
    %v1876 = vpop.f32.mrf.mxu0
    %v1877 = vadd.f32 %v1828, %v1876
    %v1878 = vpop.f32.mrf.mxu0
    %v1879 = vadd.f32 %v1830, %v1878
    %1880 = vdwg.mxu0
    %1881 = vmatpush.bf16.msra.mxu0 %v1473
    %1882 = vmatpush.bf16.msra.mxu0 %v1471
    %1883 = vmatpush.bf16.msra.mxu0 %v1469
    %1884 = vmatpush.bf16.msra.mxu0 %v1467
    %1885 = vmatpush.bf16.msra.mxu0 %v1465
    %1886 = vmatpush.bf16.msra.mxu0 %v1463
    %1887 = vmatpush.bf16.msra.mxu0 %v1461
    %1888 = vmatpush.bf16.msra.mxu0 %v1459
    %1889 = vmatmul.bf16.gmra.mxu0 %v1125
    %v1890 = vpop.f32.mrf.mxu0
    %v1891 = vadd.f32 %v1842, %v1890
    %v1892 = vpop.f32.mrf.mxu0
    %v1893 = vadd.f32 %v1844, %v1892
    %1894 = vmatmul.bf16.gmra.mxu0 %v1129
    %v1895 = vpop.f32.mrf.mxu0
    %v1896 = vadd.f32 %v1847, %v1895
    %v1897 = vpop.f32.mrf.mxu0
    %v1898 = vadd.f32 %v1849, %v1897
    %1899 = vmatmul.bf16.gmra.mxu0 %v1133
    %v1900 = vpop.f32.mrf.mxu0
    %v1901 = vadd.f32 %v1852, %v1900
    %v1902 = vpop.f32.mrf.mxu0
    %v1903 = vadd.f32 %v1854, %v1902
    %1904 = vmatmul.bf16.gmra.mxu0 %v1137
    %v1905 = vpop.f32.mrf.mxu0
    %v1906 = vadd.f32 %v1857, %v1905
    %v1907 = vpop.f32.mrf.mxu0
    %v1908 = vadd.f32 %v1859, %v1907
    %1909 = vmatmul.bf16.gmra.mxu0 %v1141
    %v1910 = vpop.f32.mrf.mxu0
    %v1911 = vadd.f32 %v1862, %v1910
    %v1912 = vpop.f32.mrf.mxu0
    %v1913 = vadd.f32 %v1864, %v1912
    %1914 = vmatmul.bf16.gmra.mxu0 %v1145
    %v1915 = vpop.f32.mrf.mxu0
    %v1916 = vadd.f32 %v1867, %v1915
    %v1917 = vpop.f32.mrf.mxu0
    %v1918 = vadd.f32 %v1869, %v1917
    %1919 = vmatmul.bf16.gmra.mxu0 %v1149
    %v1920 = vpop.f32.mrf.mxu0
    %v1921 = vadd.f32 %v1872, %v1920
    %v1922 = vpop.f32.mrf.mxu0
    %v1923 = vadd.f32 %v1874, %v1922
    %1924 = vmatmul.bf16.gmra.mxu0 %v1153
    %v1925 = vpop.f32.mrf.mxu0
    %v1926 = vadd.f32 %v1877, %v1925
    %v1927 = vpop.f32.mrf.mxu0
    %v1928 = vadd.f32 %v1879, %v1927
    %1929 = vdwg.mxu0
    %v1930 = vadd.f32 %v1695, %v1697
    %v1931 = vadd.f32 %v1930, %v1700
    %v1932 = vadd.f32 %v1931, %v1702
    %v1933 = vadd.f32 %v1932, %v1705
    %v1934 = vadd.f32 %v1933, %v1707
    %v1935 = vadd.f32 %v1934, %v1710
    %v1936 = vadd.f32 %v1935, %v1712
    %v1937 = vadd.f32 %v1936, %v1715
    %v1938 = vadd.f32 %v1937, %v1717
    %v1939 = vadd.f32 %v1938, %v1720
    %v1940 = vadd.f32 %v1939, %v1722
    %v1941 = vadd.f32 %v1940, %v1725
    %v1942 = vadd.f32 %v1941, %v1727
    %v1943 = vadd.f32 %v1942, %v1730
    %v1944 = vadd.f32 %v1943, %v1732
    %v1945 = vrot.slane %v1944, 4
    %v1946 = vadd.f32 %v1944, %v1945
    %v1947 = vrot.slane %v1946, 2
    %v1948 = vadd.f32 %v1946, %v1947
    %v1949 = vrot.slane %v1948, 1
    %v1950 = vadd.f32 %v1948, %v1949
    %v1951 = vadd.f32 %v1891, %v1893
    %v1952 = vadd.f32 %v1951, %v1896
    %v1953 = vadd.f32 %v1952, %v1898
    %v1954 = vadd.f32 %v1953, %v1901
    %v1955 = vadd.f32 %v1954, %v1903
    %v1956 = vadd.f32 %v1955, %v1906
    %v1957 = vadd.f32 %v1956, %v1908
    %v1958 = vadd.f32 %v1957, %v1911
    %v1959 = vadd.f32 %v1958, %v1913
    %v1960 = vadd.f32 %v1959, %v1916
    %v1961 = vadd.f32 %v1960, %v1918
    %v1962 = vadd.f32 %v1961, %v1921
    %v1963 = vadd.f32 %v1962, %v1923
    %v1964 = vadd.f32 %v1963, %v1926
    %v1965 = vadd.f32 %v1964, %v1928
    %v1966 = vrot.slane %v1965, 4
    %v1967 = vadd.f32 %v1965, %v1966
    %v1968 = vrot.slane %v1967, 2
    %v1969 = vadd.f32 %v1967, %v1968
    %v1970 = vrot.slane %v1969, 1
    %v1971 = vadd.f32 %v1969, %v1970
    %v1972 = vmul.f32 %v1950, 0.0078125
    %v1973 = vmul.f32 %v1971, 0.0078125
    %v1974 = vmul.f32 %v1695, %v1695
    %v1975 = vmul.f32 %v1891, %v1891
    %v1976 = vmul.f32 %v1697, %v1697
    %v1977 = vmul.f32 %v1893, %v1893
    %v1978 = vmul.f32 %v1700, %v1700
    %v1979 = vmul.f32 %v1896, %v1896
    %v1980 = vmul.f32 %v1702, %v1702
    %v1981 = vmul.f32 %v1898, %v1898
    %v1982 = vmul.f32 %v1705, %v1705
    %v1983 = vmul.f32 %v1901, %v1901
    %v1984 = vmul.f32 %v1707, %v1707
    %v1985 = vmul.f32 %v1903, %v1903
    %v1986 = vmul.f32 %v1710, %v1710
    %v1987 = vmul.f32 %v1906, %v1906
    %v1988 = vmul.f32 %v1712, %v1712
    %v1989 = vmul.f32 %v1908, %v1908
    %v1990 = vmul.f32 %v1715, %v1715
    %v1991 = vmul.f32 %v1911, %v1911
    %v1992 = vmul.f32 %v1717, %v1717
    %v1993 = vmul.f32 %v1913, %v1913
    %v1994 = vmul.f32 %v1720, %v1720
    %v1995 = vmul.f32 %v1916, %v1916
    %v1996 = vmul.f32 %v1722, %v1722
    %v1997 = vmul.f32 %v1918, %v1918
    %v1998 = vmul.f32 %v1725, %v1725
    %v1999 = vmul.f32 %v1921, %v1921
    %v2000 = vmul.f32 %v1727, %v1727
    %v2001 = vmul.f32 %v1923, %v1923
    %v2002 = vmul.f32 %v1730, %v1730
    %v2003 = vmul.f32 %v1926, %v1926
    %v2004 = vmul.f32 %v1732, %v1732
    %v2005 = vmul.f32 %v1928, %v1928
    %v2006 = vadd.f32 %v1974, %v1976
    %v2007 = vadd.f32 %v2006, %v1978
    %v2008 = vadd.f32 %v2007, %v1980
    %v2009 = vadd.f32 %v2008, %v1982
    %v2010 = vadd.f32 %v2009, %v1984
    %v2011 = vadd.f32 %v2010, %v1986
    %v2012 = vadd.f32 %v2011, %v1988
    %v2013 = vadd.f32 %v2012, %v1990
    %v2014 = vadd.f32 %v2013, %v1992
    %v2015 = vadd.f32 %v2014, %v1994
    %v2016 = vadd.f32 %v2015, %v1996
    %v2017 = vadd.f32 %v2016, %v1998
    %v2018 = vadd.f32 %v2017, %v2000
    %v2019 = vadd.f32 %v2018, %v2002
    %v2020 = vadd.f32 %v2019, %v2004
    %v2021 = vrot.slane %v2020, 4
    %v2022 = vadd.f32 %v2020, %v2021
    %v2023 = vrot.slane %v2022, 2
    %v2024 = vadd.f32 %v2022, %v2023
    %v2025 = vrot.slane %v2024, 1
    %v2026 = vadd.f32 %v2024, %v2025
    %v2027 = vadd.f32 %v1975, %v1977
    %v2028 = vadd.f32 %v2027, %v1979
    %v2029 = vadd.f32 %v2028, %v1981
    %v2030 = vadd.f32 %v2029, %v1983
    %v2031 = vadd.f32 %v2030, %v1985
    %v2032 = vadd.f32 %v2031, %v1987
    %v2033 = vadd.f32 %v2032, %v1989
    %v2034 = vadd.f32 %v2033, %v1991
    %v2035 = vadd.f32 %v2034, %v1993
    %v2036 = vadd.f32 %v2035, %v1995
    %v2037 = vadd.f32 %v2036, %v1997
    %v2038 = vadd.f32 %v2037, %v1999
    %v2039 = vadd.f32 %v2038, %v2001
    %v2040 = vadd.f32 %v2039, %v2003
    %v2041 = vadd.f32 %v2040, %v2005
    %v2042 = vrot.slane %v2041, 4
    %v2043 = vadd.f32 %v2041, %v2042
    %v2044 = vrot.slane %v2043, 2
    %v2045 = vadd.f32 %v2043, %v2044
    %v2046 = vrot.slane %v2045, 1
    %v2047 = vadd.f32 %v2045, %v2046
    %v2048 = vmul.f32 %v2026, 0.0078125
    %v2049 = vmul.f32 %v2047, 0.0078125
    %v2050 = vmul.f32 %v1972, %v1972
    %v2051 = vmul.f32 %v1973, %v1973
    %v2052 = vsub.f32 %v2048, %v2050
    %v2053 = vsub.f32 %v2049, %v2051
    %v2054 = vadd.f32 %v2052, 1e-05
    %v2055 = vadd.f32 %v2053, 1e-05
    %v2056 = vrsqrt.pop %v2054
    %v2057 = vmul.f32 %v2056, %v2054
    %v2058 = vmul.f32 %v2057, %v2056
    %v2059 = vmul.f32 0.5, %v2058
    %v2060 = vsub.f32 1.5, %v2059
    %v2061 = vmul.f32 %v2056, %v2060
    %vm2062 = vweird.f32 %v2054
    %vm2063 = vweird.f32 %v2056
    %vm2064 = vmor %vm2062, %vm2063
    %v2065 = vsel %vm2064, %v2056, %v2061
    %v2066 = vrsqrt.pop %v2055
    %v2067 = vmul.f32 %v2066, %v2055
    %v2068 = vmul.f32 %v2067, %v2066
    %v2069 = vmul.f32 0.5, %v2068
    %v2070 = vsub.f32 1.5, %v2069
    %v2071 = vmul.f32 %v2066, %v2070
    %vm2072 = vweird.f32 %v2055
    %vm2073 = vweird.f32 %v2066
    %vm2074 = vmor %vm2072, %vm2073
    %v2075 = vsel %vm2074, %v2066, %v2071
    %v2076 = vld [vmem:[#allocation10] ss:$2 sm:$0x3]
    %v2078 = vperm.slane %v2076, 0
    %v2079 = vperm.slane %v2076, 1
    %v2082 = vmul.f32 %v2065, %v2078
    %v2083 = vmul.f32 %v2075, %v2079
    %s2084 = scalar_lea.vmem [#allocation10], 1
    %v2085 = vld [vmem:[%s2084] ss:$2 sm:$0x3]
    %v2086 = vmul.f32 %v1972, %v2082
    %v2087 = vmul.f32 %v1973, %v2083
    %v2090 = vrot.slane %v2087, 7
    %v2091 = vsel %vm909, %v2086, %v2090
    %v2093 = vsub.f32 %v2085, %v2091
    %v2094 = vperm.slane %v2082, 0
    %v2095 = vperm.slane %v2083, 0
    %v2096 = vmul.f32 %v1695, %v2094
    %v2097 = vmul.f32 %v1891, %v2095
    %v2098 = vmul.f32 %v1697, %v2094
    %v2099 = vmul.f32 %v1893, %v2095
    %v2100 = vmul.f32 %v1700, %v2094
    %v2101 = vmul.f32 %v1896, %v2095
    %v2102 = vmul.f32 %v1702, %v2094
    %v2103 = vmul.f32 %v1898, %v2095
    %v2104 = vmul.f32 %v1705, %v2094
    %v2105 = vmul.f32 %v1901, %v2095
    %v2106 = vmul.f32 %v1707, %v2094
    %v2107 = vmul.f32 %v1903, %v2095
    %v2108 = vmul.f32 %v1710, %v2094
    %v2109 = vmul.f32 %v1906, %v2095
    %v2110 = vmul.f32 %v1712, %v2094
    %v2111 = vmul.f32 %v1908, %v2095
    %v2112 = vmul.f32 %v1715, %v2094
    %v2113 = vmul.f32 %v1911, %v2095
    %v2114 = vmul.f32 %v1717, %v2094
    %v2115 = vmul.f32 %v1913, %v2095
    %v2116 = vmul.f32 %v1720, %v2094
    %v2117 = vmul.f32 %v1916, %v2095
    %v2118 = vmul.f32 %v1722, %v2094
    %v2119 = vmul.f32 %v1918, %v2095
    %v2120 = vmul.f32 %v1725, %v2094
    %v2121 = vmul.f32 %v1921, %v2095
    %v2122 = vmul.f32 %v1727, %v2094
    %v2123 = vmul.f32 %v1923, %v2095
    %v2124 = vmul.f32 %v1730, %v2094
    %v2125 = vmul.f32 %v1926, %v2095
    %v2126 = vmul.f32 %v1732, %v2094
    %v2127 = vmul.f32 %v1928, %v2095
    %v2129 = vperm.slane %v2093, 0
    %v2130 = vperm.slane %v2093, 1
    %v2133 = vadd.f32 %v2096, %v2129
    %v2134 = vadd.f32 %v2097, %v2130
    %v2135 = vadd.f32 %v2098, %v2129
    %v2136 = vadd.f32 %v2099, %v2130
    %v2137 = vadd.f32 %v2100, %v2129
    %v2138 = vadd.f32 %v2101, %v2130
    %v2139 = vadd.f32 %v2102, %v2129
    %v2140 = vadd.f32 %v2103, %v2130
    %v2141 = vadd.f32 %v2104, %v2129
    %v2142 = vadd.f32 %v2105, %v2130
    %v2143 = vadd.f32 %v2106, %v2129
    %v2144 = vadd.f32 %v2107, %v2130
    %v2145 = vadd.f32 %v2108, %v2129
    %v2146 = vadd.f32 %v2109, %v2130
    %v2147 = vadd.f32 %v2110, %v2129
    %v2148 = vadd.f32 %v2111, %v2130
    %v2149 = vadd.f32 %v2112, %v2129
    %v2150 = vadd.f32 %v2113, %v2130
    %v2151 = vadd.f32 %v2114, %v2129
    %v2152 = vadd.f32 %v2115, %v2130
    %v2153 = vadd.f32 %v2116, %v2129
    %v2154 = vadd.f32 %v2117, %v2130
    %v2155 = vadd.f32 %v2118, %v2129
    %v2156 = vadd.f32 %v2119, %v2130
    %v2157 = vadd.f32 %v2120, %v2129
    %v2158 = vadd.f32 %v2121, %v2130
    %v2159 = vadd.f32 %v2122, %v2129
    %v2160 = vadd.f32 %v2123, %v2130
    %v2161 = vadd.f32 %v2124, %v2129
    %v2162 = vadd.f32 %v2125, %v2130
    %v2163 = vadd.f32 %v2126, %v2129
    %v2164 = vadd.f32 %v2127, %v2130
    %v2165 = vmax.f32 %v2133, 0.0
    %v2166 = vmax.f32 %v2134, 0.0
    %v2167 = vmax.f32 %v2135, 0.0
    %v2168 = vmax.f32 %v2136, 0.0
    %v2169 = vmax.f32 %v2137, 0.0
    %v2170 = vmax.f32 %v2138, 0.0
    %v2171 = vmax.f32 %v2139, 0.0
    %v2172 = vmax.f32 %v2140, 0.0
    %v2173 = vmax.f32 %v2141, 0.0
    %v2174 = vmax.f32 %v2142, 0.0
    %v2175 = vmax.f32 %v2143, 0.0
    %v2176 = vmax.f32 %v2144, 0.0
    %v2177 = vmax.f32 %v2145, 0.0
    %v2178 = vmax.f32 %v2146, 0.0
    %v2179 = vmax.f32 %v2147, 0.0
    %v2180 = vmax.f32 %v2148, 0.0
    %v2181 = vmax.f32 %v2149, 0.0
    %v2182 = vmax.f32 %v2150, 0.0
    %v2183 = vmax.f32 %v2151, 0.0
    %v2184 = vmax.f32 %v2152, 0.0
    %v2185 = vmax.f32 %v2153, 0.0
    %v2186 = vmax.f32 %v2154, 0.0
    %v2187 = vmax.f32 %v2155, 0.0
    %v2188 = vmax.f32 %v2156, 0.0
    %v2189 = vmax.f32 %v2157, 0.0
    %v2190 = vmax.f32 %v2158, 0.0
    %v2191 = vmax.f32 %v2159, 0.0
    %v2192 = vmax.f32 %v2160, 0.0
    %v2193 = vmax.f32 %v2161, 0.0
    %v2194 = vmax.f32 %v2162, 0.0
    %v2195 = vmax.f32 %v2163, 0.0
    %v2196 = vmax.f32 %v2164, 0.0
    %v2197 = vpack.c.bf16 %v2167, %v2165
    %v2198 = vpack.c.bf16 %v2168, %v2166
    %v2199 = vpack.c.bf16 %v2171, %v2169
    %v2200 = vpack.c.bf16 %v2172, %v2170
    %v2201 = vpack.c.bf16 %v2175, %v2173
    %v2202 = vpack.c.bf16 %v2176, %v2174
    %v2203 = vpack.c.bf16 %v2179, %v2177
    %v2204 = vpack.c.bf16 %v2180, %v2178
    %v2205 = vpack.c.bf16 %v2183, %v2181
    %v2206 = vpack.c.bf16 %v2184, %v2182
    %v2207 = vpack.c.bf16 %v2187, %v2185
    %v2208 = vpack.c.bf16 %v2188, %v2186
    %v2209 = vpack.c.bf16 %v2191, %v2189
    %v2210 = vpack.c.bf16 %v2192, %v2190
    %v2211 = vpack.c.bf16 %v2195, %v2193
    %v2212 = vpack.c.bf16 %v2196, %v2194
    %v2213 = vld [vmem:[#allocation11] sm:$0xf]
    %v2214 = vld [vmem:[#allocation11 + $0x4] sm:$0xf]
    %v2215 = vld [vmem:[#allocation11 + $0x8] sm:$0xf]
    %v2216 = vld [vmem:[#allocation11 + $0xc] sm:$0xf]
    %v2217 = vld [vmem:[#allocation11 + $0x10] sm:$0xf]
    %v2218 = vld [vmem:[#allocation11 + $0x14] sm:$0xf]
    %v2219 = vld [vmem:[#allocation11 + $0x18] sm:$0xf]
    %v2220 = vld [vmem:[#allocation11 + $0x1c] sm:$0xf]
    %v2221 = vld [vmem:[#allocation11 + $0x20] sm:$0xf]
    %v2222 = vld [vmem:[#allocation11 + $0x24] sm:$0xf]
    %v2223 = vld [vmem:[#allocation11 + $0x28] sm:$0xf]
    %v2224 = vld [vmem:[#allocation11 + $0x2c] sm:$0xf]
    %v2225 = vld [vmem:[#allocation11 + $0x30] sm:$0xf]
    %v2226 = vld [vmem:[#allocation11 + $0x34] sm:$0xf]
    %v2227 = vld [vmem:[#allocation11 + $0x38] sm:$0xf]
    %v2228 = vld [vmem:[#allocation11 + $0x3c] sm:$0xf]
    %v2229 = vld [vmem:[#allocation11 + $0x40] sm:$0xf]
    %v2230 = vld [vmem:[#allocation11 + $0x44] sm:$0xf]
    %v2231 = vld [vmem:[#allocation11 + $0x48] sm:$0xf]
    %v2232 = vld [vmem:[#allocation11 + $0x4c] sm:$0xf]
    %v2233 = vld [vmem:[#allocation11 + $0x50] sm:$0xf]
    %v2234 = vld [vmem:[#allocation11 + $0x54] sm:$0xf]
    %v2235 = vld [vmem:[#allocation11 + $0x58] sm:$0xf]
    %v2236 = vld [vmem:[#allocation11 + $0x5c] sm:$0xf]
    %v2237 = vld [vmem:[#allocation11 + $0x60] sm:$0xf]
    %v2238 = vld [vmem:[#allocation11 + $0x64] sm:$0xf]
    %v2239 = vld [vmem:[#allocation11 + $0x68] sm:$0xf]
    %v2240 = vld [vmem:[#allocation11 + $0x6c] sm:$0xf]
    %v2241 = vld [vmem:[#allocation11 + $0x70] sm:$0xf]
    %v2242 = vld [vmem:[#allocation11 + $0x74] sm:$0xf]
    %v2243 = vld [vmem:[#allocation11 + $0x78] sm:$0xf]
    %v2244 = vld [vmem:[#allocation11 + $0x7c] sm:$0xf]
    %v2277 = vunpack.c.l.b16 %v2213
    %v2278 = vunpack.c.l.b16 %v2214
    %v2279 = vunpack.c.l.b16 %v2215
    %v2280 = vunpack.c.l.b16 %v2216
    %v2281 = vunpack.c.l.b16 %v2217
    %v2282 = vunpack.c.l.b16 %v2218
    %v2283 = vunpack.c.l.b16 %v2219
    %v2284 = vunpack.c.l.b16 %v2220
    %v2285 = vunpack.c.l.b16 %v2221
    %v2286 = vunpack.c.l.b16 %v2222
    %v2287 = vunpack.c.l.b16 %v2223
    %v2288 = vunpack.c.l.b16 %v2224
    %v2289 = vunpack.c.l.b16 %v2225
    %v2290 = vunpack.c.l.b16 %v2226
    %v2291 = vunpack.c.l.b16 %v2227
    %v2292 = vunpack.c.l.b16 %v2228
    %v2293 = vunpack.c.l.b16 %v2229
    %v2294 = vunpack.c.l.b16 %v2230
    %v2295 = vunpack.c.l.b16 %v2231
    %v2296 = vunpack.c.l.b16 %v2232
    %v2297 = vunpack.c.l.b16 %v2233
    %v2298 = vunpack.c.l.b16 %v2234
    %v2299 = vunpack.c.l.b16 %v2235
    %v2300 = vunpack.c.l.b16 %v2236
    %v2301 = vunpack.c.l.b16 %v2237
    %v2302 = vunpack.c.l.b16 %v2238
    %v2303 = vunpack.c.l.b16 %v2239
    %v2304 = vunpack.c.l.b16 %v2240
    %v2305 = vunpack.c.l.b16 %v2241
    %v2306 = vunpack.c.l.b16 %v2242
    %v2307 = vunpack.c.l.b16 %v2243
    %v2308 = vunpack.c.l.b16 %v2244
    %v2309 = vpack.c.b16 %v2278, %v2277
    %v2310 = vpack.c.b16 %v2280, %v2279
    %v2311 = vpack.c.b16 %v2282, %v2281
    %v2312 = vpack.c.b16 %v2284, %v2283
    %v2313 = vpack.c.b16 %v2286, %v2285
    %v2314 = vpack.c.b16 %v2288, %v2287
    %v2315 = vpack.c.b16 %v2290, %v2289
    %v2316 = vpack.c.b16 %v2292, %v2291
    %v2317 = vpack.c.b16 %v2294, %v2293
    %v2318 = vpack.c.b16 %v2296, %v2295
    %v2319 = vpack.c.b16 %v2298, %v2297
    %v2320 = vpack.c.b16 %v2300, %v2299
    %v2321 = vpack.c.b16 %v2302, %v2301
    %v2322 = vpack.c.b16 %v2304, %v2303
    %v2323 = vpack.c.b16 %v2306, %v2305
    %v2324 = vpack.c.b16 %v2308, %v2307
    %2341 = vmatpush.bf16.msra.mxu0 %v2316
    %2342 = vmatpush.bf16.msra.mxu0 %v2315
    %2343 = vmatpush.bf16.msra.mxu0 %v2314
    %2344 = vmatpush.bf16.msra.mxu0 %v2313
    %2345 = vmatpush.bf16.msra.mxu0 %v2312
    %2346 = vmatpush.bf16.msra.mxu0 %v2311
    %2347 = vmatpush.bf16.msra.mxu0 %v2310
    %2348 = vmatpush.bf16.msra.mxu0 %v2309
    %2349 = vmatmul.bf16.gmra.mxu0 %v2197
    %v2350 = vpop.f32.mrf.mxu0
    %v2351 = vadd.f32 0.0, %v2350
    %v2352 = vpop.f32.mrf.mxu0
    %v2353 = vadd.f32 0.0, %v2352
    %2354 = vmatmul.bf16.gmra.mxu0 %v2199
    %v2355 = vpop.f32.mrf.mxu0
    %v2356 = vadd.f32 0.0, %v2355
    %v2357 = vpop.f32.mrf.mxu0
    %v2358 = vadd.f32 0.0, %v2357
    %2359 = vmatmul.bf16.gmra.mxu0 %v2201
    %v2360 = vpop.f32.mrf.mxu0
    %v2361 = vadd.f32 0.0, %v2360
    %v2362 = vpop.f32.mrf.mxu0
    %v2363 = vadd.f32 0.0, %v2362
    %2364 = vmatmul.bf16.gmra.mxu0 %v2203
    %v2365 = vpop.f32.mrf.mxu0
    %v2366 = vadd.f32 0.0, %v2365
    %v2367 = vpop.f32.mrf.mxu0
    %v2368 = vadd.f32 0.0, %v2367
    %2369 = vmatmul.bf16.gmra.mxu0 %v2205
    %v2370 = vpop.f32.mrf.mxu0
    %v2371 = vadd.f32 0.0, %v2370
    %v2372 = vpop.f32.mrf.mxu0
    %v2373 = vadd.f32 0.0, %v2372
    %2374 = vmatmul.bf16.gmra.mxu0 %v2207
    %v2375 = vpop.f32.mrf.mxu0
    %v2376 = vadd.f32 0.0, %v2375
    %v2377 = vpop.f32.mrf.mxu0
    %v2378 = vadd.f32 0.0, %v2377
    %2379 = vmatmul.bf16.gmra.mxu0 %v2209
    %v2380 = vpop.f32.mrf.mxu0
    %v2381 = vadd.f32 0.0, %v2380
    %v2382 = vpop.f32.mrf.mxu0
    %v2383 = vadd.f32 0.0, %v2382
    %2384 = vmatmul.bf16.gmra.mxu0 %v2211
    %v2385 = vpop.f32.mrf.mxu0
    %v2386 = vadd.f32 0.0, %v2385
    %v2387 = vpop.f32.mrf.mxu0
    %v2388 = vadd.f32 0.0, %v2387
    %2389 = vdwg.mxu0
    %2390 = vmatpush.bf16.msra.mxu0 %v2324
    %2391 = vmatpush.bf16.msra.mxu0 %v2323
    %2392 = vmatpush.bf16.msra.mxu0 %v2322
    %2393 = vmatpush.bf16.msra.mxu0 %v2321
    %2394 = vmatpush.bf16.msra.mxu0 %v2320
    %2395 = vmatpush.bf16.msra.mxu0 %v2319
    %2396 = vmatpush.bf16.msra.mxu0 %v2318
    %2397 = vmatpush.bf16.msra.mxu0 %v2317
    %2398 = vmatmul.bf16.gmra.mxu0 %v2198
    %v2399 = vpop.f32.mrf.mxu0
    %v2400 = vadd.f32 %v2351, %v2399
    %v2401 = vpop.f32.mrf.mxu0
    %v2402 = vadd.f32 %v2353, %v2401
    %2403 = vmatmul.bf16.gmra.mxu0 %v2200
    %v2404 = vpop.f32.mrf.mxu0
    %v2405 = vadd.f32 %v2356, %v2404
    %v2406 = vpop.f32.mrf.mxu0
    %v2407 = vadd.f32 %v2358, %v2406
    %2408 = vmatmul.bf16.gmra.mxu0 %v2202
    %v2409 = vpop.f32.mrf.mxu0
    %v2410 = vadd.f32 %v2361, %v2409
    %v2411 = vpop.f32.mrf.mxu0
    %v2412 = vadd.f32 %v2363, %v2411
    %2413 = vmatmul.bf16.gmra.mxu0 %v2204
    %v2414 = vpop.f32.mrf.mxu0
    %v2415 = vadd.f32 %v2366, %v2414
    %v2416 = vpop.f32.mrf.mxu0
    %v2417 = vadd.f32 %v2368, %v2416
    %2418 = vmatmul.bf16.gmra.mxu0 %v2206
    %v2419 = vpop.f32.mrf.mxu0
    %v2420 = vadd.f32 %v2371, %v2419
    %v2421 = vpop.f32.mrf.mxu0
    %v2422 = vadd.f32 %v2373, %v2421
    %2423 = vmatmul.bf16.gmra.mxu0 %v2208
    %v2424 = vpop.f32.mrf.mxu0
    %v2425 = vadd.f32 %v2376, %v2424
    %v2426 = vpop.f32.mrf.mxu0
    %v2427 = vadd.f32 %v2378, %v2426
    %2428 = vmatmul.bf16.gmra.mxu0 %v2210
    %v2429 = vpop.f32.mrf.mxu0
    %v2430 = vadd.f32 %v2381, %v2429
    %v2431 = vpop.f32.mrf.mxu0
    %v2432 = vadd.f32 %v2383, %v2431
    %2433 = vmatmul.bf16.gmra.mxu0 %v2212
    %v2434 = vpop.f32.mrf.mxu0
    %v2435 = vadd.f32 %v2386, %v2434
    %v2436 = vpop.f32.mrf.mxu0
    %v2437 = vadd.f32 %v2388, %v2436
    %2438 = vdwg.mxu0
    %v2439 = vadd.f32 %v2400, %v2402
    %v2440 = vadd.f32 %v2439, %v2405
    %v2441 = vadd.f32 %v2440, %v2407
    %v2442 = vadd.f32 %v2441, %v2410
    %v2443 = vadd.f32 %v2442, %v2412
    %v2444 = vadd.f32 %v2443, %v2415
    %v2445 = vadd.f32 %v2444, %v2417
    %v2446 = vadd.f32 %v2445, %v2420
    %v2447 = vadd.f32 %v2446, %v2422
    %v2448 = vadd.f32 %v2447, %v2425
    %v2449 = vadd.f32 %v2448, %v2427
    %v2450 = vadd.f32 %v2449, %v2430
    %v2451 = vadd.f32 %v2450, %v2432
    %v2452 = vadd.f32 %v2451, %v2435
    %v2453 = vadd.f32 %v2452, %v2437
    %v2454 = vrot.slane %v2453, 4
    %v2455 = vadd.f32 %v2453, %v2454
    %v2456 = vrot.slane %v2455, 2
    %v2457 = vadd.f32 %v2455, %v2456
    %v2458 = vrot.slane %v2457, 1
    %v2459 = vadd.f32 %v2457, %v2458
    %v2460 = vmul.f32 %v2459, 0.0078125
    %v2461 = vmul.f32 %v2400, %v2400
    %v2462 = vmul.f32 %v2402, %v2402
    %v2463 = vmul.f32 %v2405, %v2405
    %v2464 = vmul.f32 %v2407, %v2407
    %v2465 = vmul.f32 %v2410, %v2410
    %v2466 = vmul.f32 %v2412, %v2412
    %v2467 = vmul.f32 %v2415, %v2415
    %v2468 = vmul.f32 %v2417, %v2417
    %v2469 = vmul.f32 %v2420, %v2420
    %v2470 = vmul.f32 %v2422, %v2422
    %v2471 = vmul.f32 %v2425, %v2425
    %v2472 = vmul.f32 %v2427, %v2427
    %v2473 = vmul.f32 %v2430, %v2430
    %v2474 = vmul.f32 %v2432, %v2432
    %v2475 = vmul.f32 %v2435, %v2435
    %v2476 = vmul.f32 %v2437, %v2437
    %v2477 = vadd.f32 %v2461, %v2462
    %v2478 = vadd.f32 %v2477, %v2463
    %v2479 = vadd.f32 %v2478, %v2464
    %v2480 = vadd.f32 %v2479, %v2465
    %v2481 = vadd.f32 %v2480, %v2466
    %v2482 = vadd.f32 %v2481, %v2467
    %v2483 = vadd.f32 %v2482, %v2468
    %v2484 = vadd.f32 %v2483, %v2469
    %v2485 = vadd.f32 %v2484, %v2470
    %v2486 = vadd.f32 %v2485, %v2471
    %v2487 = vadd.f32 %v2486, %v2472
    %v2488 = vadd.f32 %v2487, %v2473
    %v2489 = vadd.f32 %v2488, %v2474
    %v2490 = vadd.f32 %v2489, %v2475
    %v2491 = vadd.f32 %v2490, %v2476
    %v2492 = vrot.slane %v2491, 4
    %v2493 = vadd.f32 %v2491, %v2492
    %v2494 = vrot.slane %v2493, 2
    %v2495 = vadd.f32 %v2493, %v2494
    %v2496 = vrot.slane %v2495, 1
    %v2497 = vadd.f32 %v2495, %v2496
    %v2498 = vmul.f32 %v2497, 0.0078125
    %v2499 = vmul.f32 %v2460, %v2460
    %v2500 = vsub.f32 %v2498, %v2499
    %v2501 = vadd.f32 %v2500, 1e-05
    %v2502 = vrsqrt.pop %v2501
    %v2503 = vmul.f32 %v2502, %v2501
    %v2504 = vmul.f32 %v2503, %v2502
    %v2505 = vmul.f32 0.5, %v2504
    %v2506 = vsub.f32 1.5, %v2505
    %v2507 = vmul.f32 %v2502, %v2506
    %vm2508 = vweird.f32 %v2501
    %vm2509 = vweird.f32 %v2502
    %vm2510 = vmor %vm2508, %vm2509
    %v2511 = vsel %vm2510, %v2502, %v2507
    %v2512 = vld [vmem:[%s6] sm:$0x1]
    %v2513 = vmul.f32 %v2511, %v2512
    %v2514 = vld [vmem:[%s6 + $0x1] sm:$0x1]
    %v2515 = vmul.f32 %v2460, %v2513
    %v2516 = vsub.f32 %v2514, %v2515
    %v2517 = vperm.slane %v2513, 0
    %v2518 = vmul.f32 %v2400, %v2517
    %v2519 = vmul.f32 %v2402, %v2517
    %v2520 = vmul.f32 %v2405, %v2517
    %v2521 = vmul.f32 %v2407, %v2517
    %v2522 = vmul.f32 %v2410, %v2517
    %v2523 = vmul.f32 %v2412, %v2517
    %v2524 = vmul.f32 %v2415, %v2517
    %v2525 = vmul.f32 %v2417, %v2517
    %v2526 = vmul.f32 %v2420, %v2517
    %v2527 = vmul.f32 %v2422, %v2517
    %v2528 = vmul.f32 %v2425, %v2517
    %v2529 = vmul.f32 %v2427, %v2517
    %v2530 = vmul.f32 %v2430, %v2517
    %v2531 = vmul.f32 %v2432, %v2517
    %v2532 = vmul.f32 %v2435, %v2517
    %v2533 = vmul.f32 %v2437, %v2517
    %v2534 = vperm.slane %v2516, 0
    %v2535 = vadd.f32 %v2518, %v2534
    %v2536 = vadd.f32 %v2519, %v2534
    %v2537 = vadd.f32 %v2520, %v2534
    %v2538 = vadd.f32 %v2521, %v2534
    %v2539 = vadd.f32 %v2522, %v2534
    %v2540 = vadd.f32 %v2523, %v2534
    %v2541 = vadd.f32 %v2524, %v2534
    %v2542 = vadd.f32 %v2525, %v2534
    %v2543 = vadd.f32 %v2526, %v2534
    %v2544 = vadd.f32 %v2527, %v2534
    %v2545 = vadd.f32 %v2528, %v2534
    %v2546 = vadd.f32 %v2529, %v2534
    %v2547 = vadd.f32 %v2530, %v2534
    %v2548 = vadd.f32 %v2531, %v2534
    %v2549 = vadd.f32 %v2532, %v2534
    %v2550 = vadd.f32 %v2533, %v2534
    %v2551 = vmax.f32 %v2535, 0.0
    %v2552 = vmax.f32 %v2536, 0.0
    %v2553 = vmax.f32 %v2537, 0.0
    %v2554 = vmax.f32 %v2538, 0.0
    %v2555 = vmax.f32 %v2539, 0.0
    %v2556 = vmax.f32 %v2540, 0.0
    %v2557 = vmax.f32 %v2541, 0.0
    %v2558 = vmax.f32 %v2542, 0.0
    %v2559 = vmax.f32 %v2543, 0.0
    %v2560 = vmax.f32 %v2544, 0.0
    %v2561 = vmax.f32 %v2545, 0.0
    %v2562 = vmax.f32 %v2546, 0.0
    %v2563 = vmax.f32 %v2547, 0.0
    %v2564 = vmax.f32 %v2548, 0.0
    %v2565 = vmax.f32 %v2549, 0.0
    %v2566 = vmax.f32 %v2550, 0.0
    %v2567 = vpack.c.bf16 %v2552, %v2551
    %v2568 = vpack.c.bf16 %v2554, %v2553
    %v2569 = vpack.c.bf16 %v2556, %v2555
    %v2570 = vpack.c.bf16 %v2558, %v2557
    %v2571 = vpack.c.bf16 %v2560, %v2559
    %v2572 = vpack.c.bf16 %v2562, %v2561
    %v2573 = vpack.c.bf16 %v2564, %v2563
    %v2574 = vpack.c.bf16 %v2566, %v2565
    %v2575 = vld [vmem:[#allocation13] sm:$0xf]
    %v2576 = vld [vmem:[#allocation13 + $0x4] sm:$0xf]
    %v2577 = vld [vmem:[#allocation13 + $0x8] sm:$0xf]
    %v2578 = vld [vmem:[#allocation13 + $0xc] sm:$0xf]
    %v2579 = vld [vmem:[#allocation13 + $0x10] sm:$0xf]
    %v2580 = vld [vmem:[#allocation13 + $0x14] sm:$0xf]
    %v2581 = vld [vmem:[#allocation13 + $0x18] sm:$0xf]
    %v2582 = vld [vmem:[#allocation13 + $0x1c] sm:$0xf]
    %v2583 = vld [vmem:[#allocation13 + $0x20] sm:$0xf]
    %v2584 = vld [vmem:[#allocation13 + $0x24] sm:$0xf]
    %v2585 = vld [vmem:[#allocation13 + $0x28] sm:$0xf]
    %v2586 = vld [vmem:[#allocation13 + $0x2c] sm:$0xf]
    %v2587 = vld [vmem:[#allocation13 + $0x30] sm:$0xf]
    %v2588 = vld [vmem:[#allocation13 + $0x34] sm:$0xf]
    %v2589 = vld [vmem:[#allocation13 + $0x38] sm:$0xf]
    %v2590 = vld [vmem:[#allocation13 + $0x3c] sm:$0xf]
    %v2591 = vld [vmem:[%s8] sm:$0x1]
    %v2593 = vperm.slane %v2591, 0
    %v2611 = vunpack.c.l.b16 %v2575
    %v2612 = vunpack.c.l.b16 %v2576
    %v2613 = vunpack.c.l.b16 %v2577
    %v2614 = vunpack.c.l.b16 %v2578
    %v2615 = vunpack.c.l.b16 %v2579
    %v2616 = vunpack.c.l.b16 %v2580
    %v2617 = vunpack.c.l.b16 %v2581
    %v2618 = vunpack.c.l.b16 %v2582
    %v2619 = vunpack.c.l.b16 %v2583
    %v2620 = vunpack.c.l.b16 %v2584
    %v2621 = vunpack.c.l.b16 %v2585
    %v2622 = vunpack.c.l.b16 %v2586
    %v2623 = vunpack.c.l.b16 %v2587
    %v2624 = vunpack.c.l.b16 %v2588
    %v2625 = vunpack.c.l.b16 %v2589
    %v2626 = vunpack.c.l.b16 %v2590
    %v2627 = vpack.c.b16 %v2612, %v2611
    %v2628 = vpack.c.b16 %v2614, %v2613
    %v2629 = vpack.c.b16 %v2616, %v2615
    %v2630 = vpack.c.b16 %v2618, %v2617
    %v2631 = vpack.c.b16 %v2620, %v2619
    %v2632 = vpack.c.b16 %v2622, %v2621
    %v2633 = vpack.c.b16 %v2624, %v2623
    %v2634 = vpack.c.b16 %v2626, %v2625
    %2643 = vmatpush.bf16.msra.mxu0 %v2634
    %2644 = vmatpush.bf16.msra.mxu0 %v2633
    %2645 = vmatpush.bf16.msra.mxu0 %v2632
    %2646 = vmatpush.bf16.msra.mxu0 %v2631
    %2647 = vmatpush.bf16.msra.mxu0 %v2630
    %2648 = vmatpush.bf16.msra.mxu0 %v2629
    %2649 = vmatpush.bf16.msra.mxu0 %v2628
    %2650 = vmatpush.bf16.msra.mxu0 %v2627
    %2651 = vmatmul.bf16.gmra.mxu0 %v2567
    %v2652 = vpop.f32.mrf.mxu0
    %v2653 = vadd.f32 %v2593, %v2652
    %v2654 = vpop.f32.mrf.mxu0
    %v2655 = vadd.f32 %v2593, %v2654
    %2656 = vmatmul.bf16.gmra.mxu0 %v2568
    %v2657 = vpop.f32.mrf.mxu0
    %v2658 = vadd.f32 %v2593, %v2657
    %v2659 = vpop.f32.mrf.mxu0
    %v2660 = vadd.f32 %v2593, %v2659
    %2661 = vmatmul.bf16.gmra.mxu0 %v2569
    %v2662 = vpop.f32.mrf.mxu0
    %v2663 = vadd.f32 %v2593, %v2662
    %v2664 = vpop.f32.mrf.mxu0
    %v2665 = vadd.f32 %v2593, %v2664
    %2666 = vmatmul.bf16.gmra.mxu0 %v2570
    %v2667 = vpop.f32.mrf.mxu0
    %v2668 = vadd.f32 %v2593, %v2667
    %v2669 = vpop.f32.mrf.mxu0
    %v2670 = vadd.f32 %v2593, %v2669
    %2671 = vmatmul.bf16.gmra.mxu0 %v2571
    %v2672 = vpop.f32.mrf.mxu0
    %v2673 = vadd.f32 %v2593, %v2672
    %v2674 = vpop.f32.mrf.mxu0
    %v2675 = vadd.f32 %v2593, %v2674
    %2676 = vmatmul.bf16.gmra.mxu0 %v2572
    %v2677 = vpop.f32.mrf.mxu0
    %v2678 = vadd.f32 %v2593, %v2677
    %v2679 = vpop.f32.mrf.mxu0
    %v2680 = vadd.f32 %v2593, %v2679
    %2681 = vmatmul.bf16.gmra.mxu0 %v2573
    %v2682 = vpop.f32.mrf.mxu0
    %v2683 = vadd.f32 %v2593, %v2682
    %v2684 = vpop.f32.mrf.mxu0
    %v2685 = vadd.f32 %v2593, %v2684
    %2686 = vmatmul.bf16.gmra.mxu0 %v2574
    %v2687 = vpop.f32.mrf.mxu0
    %v2688 = vadd.f32 %v2593, %v2687
    %v2689 = vpop.f32.mrf.mxu0
    %v2690 = vadd.f32 %v2593, %v2689
    %2691 = vdwg.mxu0
    %2692 = vst [vmem:[#allocation14] sm:$0xff] %v2653
    %2693 = vst [vmem:[#allocation14 + $0x8] sm:$0xff] %v2655
    %2694 = vst [vmem:[#allocation14 + $0x10] sm:$0xff] %v2658
    %2695 = vst [vmem:[#allocation14 + $0x18] sm:$0xff] %v2660
    %2696 = vst [vmem:[#allocation14 + $0x20] sm:$0xff] %v2663
    %2697 = vst [vmem:[#allocation14 + $0x28] sm:$0xff] %v2665
    %2698 = vst [vmem:[#allocation14 + $0x30] sm:$0xff] %v2668
    %2699 = vst [vmem:[#allocation14 + $0x38] sm:$0xff] %v2670
    %2700 = vst [vmem:[#allocation14 + $0x40] sm:$0xff] %v2673
    %2701 = vst [vmem:[#allocation14 + $0x48] sm:$0xff] %v2675
    %2702 = vst [vmem:[#allocation14 + $0x50] sm:$0xff] %v2678
    %2703 = vst [vmem:[#allocation14 + $0x58] sm:$0xff] %v2680
    %2704 = vst [vmem:[#allocation14 + $0x60] sm:$0xff] %v2683
    %2705 = vst [vmem:[#allocation14 + $0x68] sm:$0xff] %v2685
    %2706 = vst [vmem:[#allocation14 + $0x70] sm:$0xff] %v2688
    %2707 = vst [vmem:[#allocation14 + $0x78] sm:$0xff] %v2690
    // Predicated region
    $region66: #{tpu_custom_call.1} parent=1 // pred_check
      _
    $region67: #{tpu_custom_call.1} parent=1 // pred_check_branch
      %2709 = sbr.rel (0) target = $region69
    $region68: #{tpu_custom_call.1} parent=1 // pred_region
      %2711 = vsyncadd [#allocation4], 0
      %s2712 = sshll.u32 [#allocation14], 4
      %s2713 = int_to_ptr.vmem [resolvable:$true] %s2712
      %s2714 = sshll.u32 %s9, 4
      %s2715 = int_to_ptr.hbm [resolvable:$true] %s2714
      %2720 = dma.vmem_to_hbm [thread:$0]  %s2713, 2048, %s2715, [#allocation4], 128, 128, 8
    $region69: #{tpu_custom_call.1} parent=1 // pred_fallthru
      _
    // Predicated region
    $region70: #{tpu_custom_call.1} parent=1 // pred_check
      _
    $region71: #{tpu_custom_call.1} parent=1 // pred_check_branch
      %2722 = sbr.rel (0) target = $region73
    $region72: #{tpu_custom_call.1} parent=1 // pred_region
      %2724 = dma.done [#allocation4], 2048
    $region73: #{tpu_custom_call.1} parent=1 // pred_fallthru
      _
    %2725 = vsyncpa [#allocation3], 1
    %2726 = vsyncpa [#allocation6], 1
    %2727 = vsyncpa [#allocation9], 1
    %2728 = vsyncpa [#allocation12], 1
    %2729 = vsyncpa [#allocation4], 1

</llo_original>
